<compile_context>
chip_gen: v6e
topology: v6e:2x2x1
jax: 0.10.0
libtpu: 0.0.40
codegen_flags: <defaults>
</compile_context>

<pallas_src>
import functools

import jax
import jax.numpy as jnp
from jax import lax
from jax.experimental import pallas as pl
from jax.experimental.pallas import tpu as pltpu


def _multitask_kernel(nmap, nmap_pad, num_classes, h, w, pack_w,
                      x_ref, smaps_ref,
                      w_enc_ref, b_enc_ref,
                      w_heads_ref, b_heads_ref,
                      in_g_ref, in_b_ref,
                      wg_ref, bg_ref,
                      out_ref):
    num_v, tf, in_dim = x_ref.shape
    hw = smaps_ref.shape[-1]
    m = num_v * tf

    # ---- seq_encoder (per-frame linear); eval mode => z = mu (no noise/dropout)
    # TODO(synk): training-mode gaussian noise + dropout path not implemented (eval semantics only).
    x = x_ref[...].reshape(m, in_dim)                          # (m, in_dim)
    z = jnp.dot(x, w_enc_ref[...], preferred_element_type=jnp.float32) + b_enc_ref[...]

    # ---- fused heads: [weights_lin | action_scores_lin] in one MXU pass
    heads = jnp.dot(z, w_heads_ref[...], preferred_element_type=jnp.float32) + b_heads_ref[...]
    logits = heads[:, :nmap_pad]                               # padded cols biased to -1e30
    act = heads[:, nmap_pad:nmap_pad + num_classes]            # (m, num_classes)

    # softmax over maps (padded maps get exactly 0 weight)
    logits = logits - jnp.max(logits, axis=-1, keepdims=True)
    e = jnp.exp(logits)
    mw = e / jnp.sum(e, axis=-1, keepdims=True)                # (m, nmap_pad)

    # ---- InstanceNorm2d(1, affine) over the real (nmap, hw) block of each frame.
    # Padded maps are zero, so the padded-block sums equal the real-map sums;
    # denominators use the real element count nmap*hw (E[x^2]-E[x]^2 form).
    s = smaps_ref[...].reshape(m, nmap_pad, hw)                # (m, nmap_pad, hw)
    inv_n = 1.0 / float(nmap * hw)
    s_sum = jnp.sum(jnp.sum(s, axis=2, keepdims=True), axis=1, keepdims=True)
    s_sq = jnp.sum(jnp.sum(s * s, axis=2, keepdims=True), axis=1, keepdims=True)
    mean = s_sum * inv_n
    var = s_sq * inv_n - mean * mean
    scale = lax.rsqrt(var + 1e-5) * in_g_ref[...]              # (m, 1, 1)
    s_n = (s - mean) * scale + in_b_ref[...]                   # affine

    # ---- per-map weighted maps (i_fixmap), then mapOp='sum'
    ifm = mw[:, :, None] * s_n                                 # (m, nmap_pad, hw); padded maps -> 0
    fixmap = jnp.sum(ifm, axis=1)                              # (m, hw)

    # ---- gaze head: tiny N=2 output -> VPU lane reduction (w_gaze passed as (2, hw))
    wg = wg_ref[...]                                           # (2, hw)
    bg = bg_ref[...]                                           # (1, 2)
    fx = jnp.sum(fixmap * wg[0:1, :], axis=-1, keepdims=True) + bg[:, 0:1]
    fy = jnp.sum(fixmap * wg[1:2, :], axis=-1, keepdims=True) + bg[:, 1:2]
    fx = jnp.clip(fx, -1.0, 1.0)                               # (m, 1)
    fy = jnp.clip(fy, -1.0, 1.0)

    # ---- interpretable weights: i_fixmap[0, f, :, y(v,f), x(v,f)]
    # (video 0's maps at every video's fixation; video 0 occupies rows [0, tf)
    #  of this block, so no cross-grid-step state is needed.)
    ix = (0.5 * (fx + 0.999999) * float(w)).astype(jnp.int32)  # trunc toward 0, like .to(long)
    iy = (0.5 * (fy + 0.999999) * float(h)).astype(jnp.int32)
    idx = iy * w + ix                                          # (m, 1)
    onehot = (lax.broadcasted_iota(jnp.int32, (m, hw), 1) == idx).astype(jnp.float32)
    ifm0 = ifm[:tf]                                            # (tf, nmap_pad, hw) -- video 0
    # TODO(synk): static per-video unroll; for very large numV switch to a broadcast
    # gather or tile the video axis as well.
    iw_rows = []
    for v in range(num_v):
        oh_v = onehot[v * tf:(v + 1) * tf]                     # (tf, hw)
        iw_rows.append(jnp.sum(ifm0 * oh_v[:, None, :], axis=2))   # (tf, nmap_pad)
    iw = jnp.concatenate(iw_rows, axis=0)                      # (m, nmap_pad)

    # ---- pack everything into one lane-dense slab (single unmasked store)
    tail = pack_w - (num_classes + 2 + nmap_pad)
    pieces = [act, fx, fy, iw]
    if tail:
        pieces.append(jnp.zeros((m, tail), jnp.float32))
    packed = jnp.concatenate(pieces, axis=-1)                  # (m, pack_w)
    out_ref[...] = packed.reshape(num_v, tf, pack_w)


def _pick_frame_tile(frs, max_tile=64):
    """Largest frame tile <= max_tile that divides frs and is a multiple of 8."""
    if frs <= max_tile:
        return frs
    for t in range(max_tile, 0, -8):
        if t % 8 == 0 and frs % t == 0:
            return t
    return frs


def multitask_forward(params, x, smaps):
    numV, frs, in_dim = x.shape
    _, _, nmap, h, w = smaps.shape
    hw = h * w
    zlength = params["w_enc"].shape[1]
    num_classes = params["w_act"].shape[1]

    nmap_pad = ((nmap + 7) // 8) * 8
    pack_w = ((num_classes + 2 + nmap_pad + 127) // 128) * 128
    tf = _pick_frame_tile(frs)
    num_ft = frs // tf

    # ---- wrapper-side layout prep: flatten spatial, pad map axis, fuse heads
    smaps_f = smaps.reshape(numV, frs, nmap, hw)
    if nmap_pad > nmap:
        smaps_f = jnp.pad(smaps_f, ((0, 0), (0, 0), (0, nmap_pad - nmap), (0, 0)))
    w_wl_p = jnp.pad(params["w_wl"], ((0, 0), (0, nmap_pad - nmap)))
    b_wl_p = jnp.pad(params["b_wl"], ((0, 0), (0, nmap_pad - nmap)),
                     constant_values=-1e30)                    # padded maps -> softmax weight 0
    w_heads = jnp.concatenate([w_wl_p, params["w_act"]], axis=1)   # (zlength, nmap_pad + nc)
    b_heads = jnp.concatenate([b_wl_p, params["b_act"]], axis=1)   # (1, nmap_pad + nc)
    wg_t = params["w_gaze"].T                                      # (2, hw) -- lane-friendly

    kernel = functools.partial(_multitask_kernel, nmap, nmap_pad, num_classes, h, w, pack_w)

    def full_spec(shape):
        n = len(shape)
        return pl.BlockSpec(shape, lambda ft, _n=n: (0,) * _n)

    grid_spec = pltpu.PrefetchScalarGridSpec(
        num_scalar_prefetch=0,
        grid=(num_ft,),
        in_specs=[
            pl.BlockSpec((numV, tf, in_dim), lambda ft: (0, ft, 0)),
            pl.BlockSpec((numV, tf, nmap_pad, hw), lambda ft: (0, ft, 0, 0)),
            full_spec(params["w_enc"].shape),
            full_spec(params["b_enc"].shape),
            full_spec(w_heads.shape),
            full_spec(b_heads.shape),
            full_spec(params["in_gamma"].shape),
            full_spec(params["in_beta"].shape),
            full_spec(wg_t.shape),
            full_spec(params["b_gaze"].shape),
        ],
        out_specs=pl.BlockSpec((numV, tf, pack_w), lambda ft: (0, ft, 0)),
    )

    nh = nmap_pad + num_classes
    flops = int(2 * numV * frs * (in_dim * zlength + zlength * nh + 2 * hw)
                + 12 * numV * frs * nmap_pad * hw)
    transcendentals = int(numV * frs * (nmap_pad + 1))
    bytes_accessed = int(4 * (x.size + smaps_f.size + numV * frs * pack_w
                              + params["w_enc"].size + params["b_enc"].size
                              + w_heads.size + b_heads.size + wg_t.size
                              + params["b_gaze"].size + 2))

    packed = pl.pallas_call(
        kernel,
        out_shape=jax.ShapeDtypeStruct((numV, frs, pack_w), jnp.float32),
        grid_spec=grid_spec,
        compiler_params=pltpu.CompilerParams(dimension_semantics=("parallel",)),
        cost_estimate=pl.CostEstimate(flops=flops,
                                      transcendentals=transcendentals,
                                      bytes_accessed=bytes_accessed),
    )(x, smaps_f,
      params["w_enc"], params["b_enc"],
      w_heads, b_heads,
      params["in_gamma"], params["in_beta"],
      wg_t, params["b_gaze"])

    act = packed[:, :, :num_classes]
    fix = packed[:, :, num_classes:num_classes + 2]
    iw = packed[:, :, num_classes + 2:num_classes + 2 + nmap]  # drop padded maps
    interpretable_w = iw - jnp.min(iw)                         # final global-min shift (plain-JAX glue)
    return act, fix, interpretable_w


def make_params(key, in_dim, zlength, nmap, hw, num_classes):
    ks = jax.random.split(key, 6)
    return {
        "w_enc": 0.10 * jax.random.normal(ks[0], (in_dim, zlength), jnp.float32),
        "b_enc": 0.01 * jax.random.normal(ks[1], (1, zlength), jnp.float32),
        "w_wl": 0.10 * jax.random.normal(ks[2], (zlength, nmap), jnp.float32),
        "b_wl": 0.01 * jax.random.normal(ks[3], (1, nmap), jnp.float32),
        # InstanceNorm2d(1, affine=True): weight init 1, bias init 0
        "in_gamma": jnp.ones((1, 1), jnp.float32),
        "in_beta": jnp.zeros((1, 1), jnp.float32),
        "w_gaze": 0.05 * jax.random.normal(ks[4], (hw, 2), jnp.float32),
        "b_gaze": jnp.zeros((1, 2), jnp.float32),
        # nn.init.normal_(std=0.1) / constant_(0.0)
        "w_act": 0.10 * jax.random.normal(ks[5], (zlength, num_classes), jnp.float32),
        "b_act": jnp.zeros((1, num_classes), jnp.float32),
    }


def _reference_forward(params, x, smaps):
    """Pure-jnp mirror of the PyTorch eval forward (up to the fixation gather)."""
    numV, frs, nmap, h, w = smaps.shape
    hw = h * w
    z = jnp.einsum("vfi,ij->vfj", x, params["w_enc"]) + params["b_enc"]
    mw = jax.nn.softmax(jnp.einsum("vfj,jk->vfk", z, params["w_wl"]) + params["b_wl"], axis=-1)
    s = smaps.reshape(numV, frs, nmap, hw)
    mean = jnp.mean(s, axis=(2, 3), keepdims=True)
    var = jnp.mean((s - mean) ** 2, axis=(2, 3), keepdims=True)
    s_n = (s - mean) * lax.rsqrt(var + 1e-5) * params["in_gamma"][0, 0] + params["in_beta"][0, 0]
    ifm = mw[..., None] * s_n                                  # (numV, frs, nmap, hw)
    fixmap = ifm.sum(axis=2)                                   # (numV, frs, hw)
    fix = jnp.clip(jnp.einsum("vfl,lc->vfc", fixmap, params["w_gaze"]) + params["b_gaze"],
                   -1.0, 1.0)
    act = jnp.einsum("vfj,jc->vfc", z, params["w_act"]) + params["b_act"]
    return act, fix, ifm


if __name__ == "__main__":
    # TODO(synk): fmap branch (fmap_lin Conv2d) and mapOp conv variants ('1x_conv1x1',
    # '1x_conv3x3', '2x_conv3x3') are not exercised with the default config and are omitted.
    numV, frs, in_dim = 2, 8, 16
    zlength, nmap, num_classes = 32, 9, 4
    h, w = 16, 16  # gazeMapSize

    key = jax.random.PRNGKey(0)
    kp, kx, ks = jax.random.split(key, 3)
    params = make_params(kp, in_dim, zlength, nmap, h * w, num_classes)
    x = jax.random.normal(kx, (numV, frs, in_dim), jnp.float32)
    smaps = jax.random.uniform(ks, (numV, frs, nmap, h, w), jnp.float32)

    action_scores, fixation, interpretable_w = multitask_forward(params, x, smaps)
    jax.block_until_ready((action_scores, fixation, interpretable_w))

    assert action_scores.shape == (numV, frs, num_classes)
    assert fixation.shape == (numV, frs, 2)
    assert interpretable_w.shape == (numV, frs, nmap)
    assert bool(jnp.all(jnp.isfinite(action_scores)))
    assert bool(jnp.all(jnp.isfinite(fixation)))
    assert bool(jnp.all(jnp.isfinite(interpretable_w)))

    # ---- correctness check vs. a pure-jnp reference
    act_ref, fix_ref, ifm_ref = _reference_forward(params, x, smaps)
    ixr = (0.5 * (fixation[..., 0] + 0.999999) * w).astype(jnp.int32)
    iyr = (0.5 * (fixation[..., 1] + 0.999999) * h).astype(jnp.int32)
    idxr = iyr * w + ixr                                       # (numV, frs)
    ifm0 = ifm_ref[0].reshape(frs, nmap, h * w)                # video 0's i_fixmap
    iw_ref = ifm0[jnp.arange(frs)[None, :, None],
                  jnp.arange(nmap)[None, None, :],
                  idxr[:, :, None]]                            # (numV, frs, nmap)
    iw_ref = iw_ref - jnp.min(iw_ref)

    assert bool(jnp.allclose(action_scores, act_ref, atol=2e-2, rtol=2e-2))
    assert bool(jnp.allclose(fixation, fix_ref, atol=2e-2, rtol=2e-2))
    assert bool(jnp.allclose(interpretable_w, iw_ref, atol=2e-2, rtol=2e-2))

    print("KERNEL_OK")
</pallas_src>

<mosaic_0001>
module attributes {stable_mosaic.version = 11 : i64} {
  func.func @_multitask_kernel(%arg0: i32, %arg1: memref<2x8x16xf32, #tpu.memory_space<vmem>>, %arg2: memref<2x8x16x256xf32, #tpu.memory_space<vmem>>, %arg3: memref<16x32xf32, #tpu.memory_space<vmem>>, %arg4: memref<1x32xf32, #tpu.memory_space<vmem>>, %arg5: memref<32x20xf32, #tpu.memory_space<vmem>>, %arg6: memref<1x20xf32, #tpu.memory_space<vmem>>, %arg7: memref<1x1xf32, #tpu.memory_space<vmem>>, %arg8: memref<1x1xf32, #tpu.memory_space<vmem>>, %arg9: memref<2x256xf32, #tpu.memory_space<vmem>>, %arg10: memref<1x2xf32, #tpu.memory_space<vmem>>, %arg11: memref<2x8x128xf32, #tpu.memory_space<vmem>>) attributes {dimension_semantics = [#tpu.dimension_semantics<parallel>], iteration_bounds = array<i64: 1>, scalar_prefetch = 0 : i64, scratch_operands = 0 : i64, tpu.core_type = #tpu.core_type<tc>, window_params = [{transform_indices = @transform_0, window_bounds = array<i64: 2, 8, 16>}, {transform_indices = @transform_1, window_bounds = array<i64: 2, 8, 16, 256>}, {pipeline_mode = #tpu.pipeline_mode<synchronous>, transform_indices = @transform_2, window_bounds = array<i64: 16, 32>}, {pipeline_mode = #tpu.pipeline_mode<synchronous>, transform_indices = @transform_3, window_bounds = array<i64: 1, 32>}, {pipeline_mode = #tpu.pipeline_mode<synchronous>, transform_indices = @transform_4, window_bounds = array<i64: 32, 20>}, {pipeline_mode = #tpu.pipeline_mode<synchronous>, transform_indices = @transform_5, window_bounds = array<i64: 1, 20>}, {pipeline_mode = #tpu.pipeline_mode<synchronous>, transform_indices = @transform_6, window_bounds = array<i64: 1, 1>}, {pipeline_mode = #tpu.pipeline_mode<synchronous>, transform_indices = @transform_7, window_bounds = array<i64: 1, 1>}, {pipeline_mode = #tpu.pipeline_mode<synchronous>, transform_indices = @transform_8, window_bounds = array<i64: 2, 256>}, {pipeline_mode = #tpu.pipeline_mode<synchronous>, transform_indices = @transform_9, window_bounds = array<i64: 1, 2>}, {transform_indices = @transform_10, window_bounds = array<i64: 2, 8, 128>}]} {
    %c0 = arith.constant 0 : index
    %c0_0 = arith.constant 0 : index
    %c0_1 = arith.constant 0 : index
    %0 = vector.load %arg1[%c0, %c0_0, %c0_1] : memref<2x8x16xf32, #tpu.memory_space<vmem>>, vector<2x8x16xf32>
    %1 = vector.shape_cast %0 : vector<2x8x16xf32> to vector<16x16xf32>
    %c0_2 = arith.constant 0 : index
    %c0_3 = arith.constant 0 : index
    %2 = vector.load %arg3[%c0_2, %c0_3] : memref<16x32xf32, #tpu.memory_space<vmem>>, vector<16x32xf32>
    %cst = arith.constant dense<0.000000e+00> : vector<16x32xf32>
    %3 = tpu.matmul %1, %2, %cst {dimension_numbers = #tpu.dot_dimension_numbers<[1], [0], [0], [1], [0, 0, 1, 1], [], []>} : vector<16x16xf32>, vector<16x32xf32>, vector<16x32xf32> -> vector<16x32xf32>
    %c0_4 = arith.constant 0 : index
    %c0_5 = arith.constant 0 : index
    %4 = vector.load %arg4[%c0_4, %c0_5] : memref<1x32xf32, #tpu.memory_space<vmem>>, vector<1x32xf32>
    %5 = vector.broadcast %4 : vector<1x32xf32> to vector<16x32xf32>
    %6 = arith.addf %3, %5 : vector<16x32xf32>
    %c0_6 = arith.constant 0 : index
    %c0_7 = arith.constant 0 : index
    %7 = vector.load %arg5[%c0_6, %c0_7] : memref<32x20xf32, #tpu.memory_space<vmem>>, vector<32x20xf32>
    %cst_8 = arith.constant dense<0.000000e+00> : vector<16x20xf32>
    %8 = tpu.matmul %6, %7, %cst_8 {dimension_numbers = #tpu.dot_dimension_numbers<[1], [0], [0], [1], [0, 0, 1, 1], [], []>} : vector<16x32xf32>, vector<32x20xf32>, vector<16x20xf32> -> vector<16x20xf32>
    %c0_9 = arith.constant 0 : index
    %c0_10 = arith.constant 0 : index
    %9 = vector.load %arg6[%c0_9, %c0_10] : memref<1x20xf32, #tpu.memory_space<vmem>>, vector<1x20xf32>
    %10 = vector.broadcast %9 : vector<1x20xf32> to vector<16x20xf32>
    %11 = arith.addf %8, %10 : vector<16x20xf32>
    %12 = vector.extract_strided_slice %11 {offsets = [0, 0], sizes = [16, 16], strides = [1, 1]} : vector<16x20xf32> to vector<16x16xf32>
    %13 = vector.extract_strided_slice %11 {offsets = [0, 16], sizes = [16, 4], strides = [1, 1]} : vector<16x20xf32> to vector<16x4xf32>
    %cst_11 = arith.constant dense<0xFF800000> : vector<16xf32>
    %14 = vector.multi_reduction <maximumf>, %12, %cst_11 [1] : vector<16x16xf32> to vector<16xf32>
    %15 = vector.shape_cast %14 : vector<16xf32> to vector<16x1xf32>
    %16 = vector.broadcast %15 : vector<16x1xf32> to vector<16x16xf32>
    %17 = arith.subf %12, %16 : vector<16x16xf32>
    %18 = math.exp %17 : vector<16x16xf32>
    %cst_12 = arith.constant dense<0.000000e+00> : vector<16xf32>
    %19 = vector.multi_reduction <add>, %18, %cst_12 [1] : vector<16x16xf32> to vector<16xf32>
    %20 = vector.shape_cast %19 : vector<16xf32> to vector<16x1xf32>
    %21 = vector.broadcast %20 : vector<16x1xf32> to vector<16x16xf32>
    %22 = arith.divf %18, %21 : vector<16x16xf32>
    %c0_13 = arith.constant 0 : index
    %c0_14 = arith.constant 0 : index
    %c0_15 = arith.constant 0 : index
    %c0_16 = arith.constant 0 : index
    %23 = vector.load %arg2[%c0_13, %c0_14, %c0_15, %c0_16] : memref<2x8x16x256xf32, #tpu.memory_space<vmem>>, vector<2x8x16x256xf32>
    %24 = vector.shape_cast %23 : vector<2x8x16x256xf32> to vector<16x16x256xf32>
    %cst_17 = arith.constant dense<0.000000e+00> : vector<16x16xf32>
    %25 = vector.multi_reduction <add>, %24, %cst_17 [2] : vector<16x16x256xf32> to vector<16x16xf32>
    %26 = vector.shape_cast %25 : vector<16x16xf32> to vector<16x16x1xf32>
    %cst_18 = arith.constant dense<0.000000e+00> : vector<16x1xf32>
    %27 = vector.multi_reduction <add>, %26, %cst_18 [1] : vector<16x16x1xf32> to vector<16x1xf32>
    %28 = vector.shape_cast %27 : vector<16x1xf32> to vector<16x1x1xf32>
    %29 = arith.mulf %24, %24 : vector<16x16x256xf32>
    %cst_19 = arith.constant dense<0.000000e+00> : vector<16x16xf32>
    %30 = vector.multi_reduction <add>, %29, %cst_19 [2] : vector<16x16x256xf32> to vector<16x16xf32>
    %31 = vector.shape_cast %30 : vector<16x16xf32> to vector<16x16x1xf32>
    %cst_20 = arith.constant dense<0.000000e+00> : vector<16x1xf32>
    %32 = vector.multi_reduction <add>, %31, %cst_20 [1] : vector<16x16x1xf32> to vector<16x1xf32>
    %33 = vector.shape_cast %32 : vector<16x1xf32> to vector<16x1x1xf32>
    %cst_21 = arith.constant 4.34027781E-4 : f32
    %34 = vector.broadcast %cst_21 : f32 to vector<16x1x1xf32>
    %35 = arith.mulf %28, %34 : vector<16x1x1xf32>
    %cst_22 = arith.constant 4.34027781E-4 : f32
    %36 = vector.broadcast %cst_22 : f32 to vector<16x1x1xf32>
    %37 = arith.mulf %33, %36 : vector<16x1x1xf32>
    %38 = arith.mulf %35, %35 : vector<16x1x1xf32>
    %39 = arith.subf %37, %38 : vector<16x1x1xf32>
    %cst_23 = arith.constant 9.99999974E-6 : f32
    %40 = vector.broadcast %cst_23 : f32 to vector<16x1x1xf32>
    %41 = arith.addf %39, %40 : vector<16x1x1xf32>
    %42 = math.rsqrt %41 : vector<16x1x1xf32>
    %c0_24 = arith.constant 0 : index
    %c0_25 = arith.constant 0 : index
    %43 = vector.load %arg7[%c0_24, %c0_25] : memref<1x1xf32, #tpu.memory_space<vmem>>, vector<1x1xf32>
    %44 = vector.shape_cast %43 : vector<1x1xf32> to vector<1x1x1xf32>
    %45 = vector.broadcast %44 : vector<1x1x1xf32> to vector<16x1x1xf32>
    %46 = arith.mulf %42, %45 : vector<16x1x1xf32>
    %47 = vector.broadcast %35 : vector<16x1x1xf32> to vector<16x16x256xf32>
    %48 = arith.subf %24, %47 : vector<16x16x256xf32>
    %49 = vector.broadcast %46 : vector<16x1x1xf32> to vector<16x16x256xf32>
    %50 = arith.mulf %48, %49 : vector<16x16x256xf32>
    %c0_26 = arith.constant 0 : index
    %c0_27 = arith.constant 0 : index
    %51 = vector.load %arg8[%c0_26, %c0_27] : memref<1x1xf32, #tpu.memory_space<vmem>>, vector<1x1xf32>
    %52 = vector.shape_cast %51 : vector<1x1xf32> to vector<1x1x1xf32>
    %53 = vector.broadcast %52 : vector<1x1x1xf32> to vector<16x16x256xf32>
    %54 = arith.addf %50, %53 : vector<16x16x256xf32>
    %55 = vector.shape_cast %22 : vector<16x16xf32> to vector<16x16x1xf32>
    %56 = vector.broadcast %55 : vector<16x16x1xf32> to vector<16x16x256xf32>
    %57 = arith.mulf %56, %54 : vector<16x16x256xf32>
    %cst_28 = arith.constant dense<0.000000e+00> : vector<16x256xf32>
    %58 = vector.multi_reduction <add>, %57, %cst_28 [1] : vector<16x16x256xf32> to vector<16x256xf32>
    %c0_29 = arith.constant 0 : index
    %c0_30 = arith.constant 0 : index
    %59 = vector.load %arg9[%c0_29, %c0_30] : memref<2x256xf32, #tpu.memory_space<vmem>>, vector<2x256xf32>
    %c0_31 = arith.constant 0 : index
    %c0_32 = arith.constant 0 : index
    %60 = vector.load %arg10[%c0_31, %c0_32] : memref<1x2xf32, #tpu.memory_space<vmem>>, vector<1x2xf32>
    %61 = vector.extract_strided_slice %59 {offsets = [0, 0], sizes = [1, 256], strides = [1, 1]} : vector<2x256xf32> to vector<1x256xf32>
    %62 = vector.broadcast %61 : vector<1x256xf32> to vector<16x256xf32>
    %63 = arith.mulf %58, %62 : vector<16x256xf32>
    %cst_33 = arith.constant dense<0.000000e+00> : vector<16xf32>
    %64 = vector.multi_reduction <add>, %63, %cst_33 [1] : vector<16x256xf32> to vector<16xf32>
    %65 = vector.shape_cast %64 : vector<16xf32> to vector<16x1xf32>
    %66 = vector.extract_strided_slice %60 {offsets = [0, 0], sizes = [1, 1], strides = [1, 1]} : vector<1x2xf32> to vector<1x1xf32>
    %67 = vector.broadcast %66 : vector<1x1xf32> to vector<16x1xf32>
    %68 = arith.addf %65, %67 : vector<16x1xf32>
    %69 = vector.extract_strided_slice %59 {offsets = [1, 0], sizes = [1, 256], strides = [1, 1]} : vector<2x256xf32> to vector<1x256xf32>
    %70 = vector.broadcast %69 : vector<1x256xf32> to vector<16x256xf32>
    %71 = arith.mulf %58, %70 : vector<16x256xf32>
    %cst_34 = arith.constant dense<0.000000e+00> : vector<16xf32>
    %72 = vector.multi_reduction <add>, %71, %cst_34 [1] : vector<16x256xf32> to vector<16xf32>
    %73 = vector.shape_cast %72 : vector<16xf32> to vector<16x1xf32>
    %74 = vector.extract_strided_slice %60 {offsets = [0, 1], sizes = [1, 1], strides = [1, 1]} : vector<1x2xf32> to vector<1x1xf32>
    %75 = vector.broadcast %74 : vector<1x1xf32> to vector<16x1xf32>
    %76 = arith.addf %73, %75 : vector<16x1xf32>
    %cst_35 = arith.constant -1.000000e+00 : f32
    %cst_36 = arith.constant 1.000000e+00 : f32
    %77 = vector.broadcast %cst_35 : f32 to vector<16x1xf32>
    %78 = arith.maximumf %77, %68 : vector<16x1xf32>
    %79 = vector.broadcast %cst_36 : f32 to vector<16x1xf32>
    %80 = arith.minimumf %79, %78 : vector<16x1xf32>
    %cst_37 = arith.constant -1.000000e+00 : f32
    %cst_38 = arith.constant 1.000000e+00 : f32
    %81 = vector.broadcast %cst_37 : f32 to vector<16x1xf32>
    %82 = arith.maximumf %81, %76 : vector<16x1xf32>
    %83 = vector.broadcast %cst_38 : f32 to vector<16x1xf32>
    %84 = arith.minimumf %83, %82 : vector<16x1xf32>
    %cst_39 = arith.constant 0.999998986 : f32
    %85 = vector.broadcast %cst_39 : f32 to vector<16x1xf32>
    %86 = arith.addf %80, %85 : vector<16x1xf32>
    %cst_40 = arith.constant 5.000000e-01 : f32
    %87 = vector.broadcast %cst_40 : f32 to vector<16x1xf32>
    %88 = arith.mulf %87, %86 : vector<16x1xf32>
    %cst_41 = arith.constant 1.600000e+01 : f32
    %89 = vector.broadcast %cst_41 : f32 to vector<16x1xf32>
    %90 = arith.mulf %88, %89 : vector<16x1xf32>
    %91 = arith.fptosi %90 : vector<16x1xf32> to vector<16x1xi32>
    %cst_42 = arith.constant 0.999998986 : f32
    %92 = vector.broadcast %cst_42 : f32 to vector<16x1xf32>
    %93 = arith.addf %84, %92 : vector<16x1xf32>
    %cst_43 = arith.constant 5.000000e-01 : f32
    %94 = vector.broadcast %cst_43 : f32 to vector<16x1xf32>
    %95 = arith.mulf %94, %93 : vector<16x1xf32>
    %cst_44 = arith.constant 1.600000e+01 : f32
    %96 = vector.broadcast %cst_44 : f32 to vector<16x1xf32>
    %97 = arith.mulf %95, %96 : vector<16x1xf32>
    %98 = arith.fptosi %97 : vector<16x1xf32> to vector<16x1xi32>
    %c16_i32 = arith.constant 16 : i32
    %99 = vector.broadcast %c16_i32 : i32 to vector<16x1xi32>
    %100 = arith.muli %98, %99 : vector<16x1xi32>
    %101 = arith.addi %100, %91 : vector<16x1xi32>
    %102 = tpu.iota {dimensions = array<i32: 1>} : vector<16x256xi32>
    %103 = vector.broadcast %101 : vector<16x1xi32> to vector<16x256xi32>
    %104 = arith.cmpi eq, %102, %103 : vector<16x256xi32>
    %105 = arith.extui %104 : vector<16x256xi1> to vector<16x256xi32>
    %106 = arith.sitofp %105 : vector<16x256xi32> to vector<16x256xf32>
    %107 = vector.extract_strided_slice %57 {offsets = [0, 0, 0], sizes = [8, 16, 256], strides = [1, 1, 1]} : vector<16x16x256xf32> to vector<8x16x256xf32>
    %108 = vector.extract_strided_slice %106 {offsets = [0, 0], sizes = [8, 256], strides = [1, 1]} : vector<16x256xf32> to vector<8x256xf32>
    %109 = vector.shape_cast %108 : vector<8x256xf32> to vector<8x1x256xf32>
    %110 = vector.broadcast %109 : vector<8x1x256xf32> to vector<8x16x256xf32>
    %111 = arith.mulf %107, %110 : vector<8x16x256xf32>
    %cst_45 = arith.constant dense<0.000000e+00> : vector<8x16xf32>
    %112 = vector.multi_reduction <add>, %111, %cst_45 [2] : vector<8x16x256xf32> to vector<8x16xf32>
    %113 = vector.extract_strided_slice %106 {offsets = [8, 0], sizes = [8, 256], strides = [1, 1]} : vector<16x256xf32> to vector<8x256xf32>
    %114 = vector.shape_cast %113 : vector<8x256xf32> to vector<8x1x256xf32>
    %115 = vector.broadcast %114 : vector<8x1x256xf32> to vector<8x16x256xf32>
    %116 = arith.mulf %107, %115 : vector<8x16x256xf32>
    %cst_46 = arith.constant dense<0.000000e+00> : vector<8x16xf32>
    %117 = vector.multi_reduction <add>, %116, %cst_46 [2] : vector<8x16x256xf32> to vector<8x16xf32>
    %118 = tpu.concatenate %112, %117 in 0 : vector<8x16xf32>, vector<8x16xf32> -> vector<16x16xf32>
    %cst_47 = arith.constant 0.000000e+00 : f32
    %119 = vector.broadcast %cst_47 : f32 to vector<16x106xf32>
    %120 = tpu.concatenate %13, %80, %84, %118, %119 in 1 : vector<16x4xf32>, vector<16x1xf32>, vector<16x1xf32>, vector<16x16xf32>, vector<16x106xf32> -> vector<16x128xf32>
    %121 = vector.shape_cast %120 : vector<16x128xf32> to vector<2x8x128xf32>
    %c0_48 = arith.constant 0 : index
    %c0_49 = arith.constant 0 : index
    %c0_50 = arith.constant 0 : index
    %122 = vector.load %arg11[%c0_48, %c0_49, %c0_50] : memref<2x8x128xf32, #tpu.memory_space<vmem>>, vector<2x8x128xf32>
    tpu.vector_store %arg11[%c0_48, %c0_49, %c0_50], %121 {strides = array<i32>} : memref<2x8x128xf32, #tpu.memory_space<vmem>>, vector<2x8x128xf32>,
    return
  }
  func.func @transform_0(%arg0: i32) -> (i32, i32, i32) {
    %c0_i32 = arith.constant 0 : i32
    %c0_i32_0 = arith.constant 0 : i32
    %c0_i32_1 = arith.constant 0 : i32
    return %c0_i32, %arg0, %c0_i32_0 : i32, i32, i32
  }
  func.func @transform_1(%arg0: i32) -> (i32, i32, i32, i32) {
    %c0_i32 = arith.constant 0 : i32
    %c0_i32_0 = arith.constant 0 : i32
    %c0_i32_1 = arith.constant 0 : i32
    %c0_i32_2 = arith.constant 0 : i32
    return %c0_i32, %arg0, %c0_i32_0, %c0_i32_1 : i32, i32, i32, i32
  }
  func.func @transform_2(%arg0: i32) -> (i32, i32) {
    %c0_i32 = arith.constant 0 : i32
    %c0_i32_0 = arith.constant 0 : i32
    %c0_i32_1 = arith.constant 0 : i32
    return %c0_i32, %c0_i32_0 : i32, i32
  }
  func.func @transform_3(%arg0: i32) -> (i32, i32) {
    %c0_i32 = arith.constant 0 : i32
    %c0_i32_0 = arith.constant 0 : i32
    %c0_i32_1 = arith.constant 0 : i32
    return %c0_i32, %c0_i32_0 : i32, i32
  }
  func.func @transform_4(%arg0: i32) -> (i32, i32) {
    %c0_i32 = arith.constant 0 : i32
    %c0_i32_0 = arith.constant 0 : i32
    %c0_i32_1 = arith.constant 0 : i32
    return %c0_i32, %c0_i32_0 : i32, i32
  }
  func.func @transform_5(%arg0: i32) -> (i32, i32) {
    %c0_i32 = arith.constant 0 : i32
    %c0_i32_0 = arith.constant 0 : i32
    %c0_i32_1 = arith.constant 0 : i32
    return %c0_i32, %c0_i32_0 : i32, i32
  }
  func.func @transform_6(%arg0: i32) -> (i32, i32) {
    %c0_i32 = arith.constant 0 : i32
    %c0_i32_0 = arith.constant 0 : i32
    %c0_i32_1 = arith.constant 0 : i32
    return %c0_i32, %c0_i32_0 : i32, i32
  }
  func.func @transform_7(%arg0: i32) -> (i32, i32) {
    %c0_i32 = arith.constant 0 : i32
    %c0_i32_0 = arith.constant 0 : i32
    %c0_i32_1 = arith.constant 0 : i32
    return %c0_i32, %c0_i32_0 : i32, i32
  }
  func.func @transform_8(%arg0: i32) -> (i32, i32) {
    %c0_i32 = arith.constant 0 : i32
    %c0_i32_0 = arith.constant 0 : i32
    %c0_i32_1 = arith.constant 0 : i32
    return %c0_i32, %c0_i32_0 : i32, i32
  }
  func.func @transform_9(%arg0: i32) -> (i32, i32) {
    %c0_i32 = arith.constant 0 : i32
    %c0_i32_0 = arith.constant 0 : i32
    %c0_i32_1 = arith.constant 0 : i32
    return %c0_i32, %c0_i32_0 : i32, i32
  }
  func.func @transform_10(%arg0: i32) -> (i32, i32, i32) {
    %c0_i32 = arith.constant 0 : i32
    %c0_i32_0 = arith.constant 0 : i32
    %c0_i32_1 = arith.constant 0 : i32
    return %c0_i32, %arg0, %c0_i32_0 : i32, i32, i32
  }
}

</mosaic_0001>

<llo_original>
// kernel: tpu_custom_call.1
$region0: #{tpu_custom_call.1}
  #allocation0 [shape = 'u32[]', space=smem, size = 0x4, offset = 0x4, fixed_abs, tag = 'smem constant byte address 0x4 - core index']
  #allocation1 [shape = 'u32[144,128]{1,0:T(1,128)}', space=vmem, size = 0x12000, scoped, tag = 'internal scratch']
  #allocation2 [shape = 'f32[1,1]{1,0:T(1,128)S(1)}', space=vmem, size = 0x200, scoped, tag = 'scoped memory for tpu_custom_call.1']
  #allocation3 [shape = 'f32[1,1]{1,0:T(1,128)S(1)}', space=vmem, size = 0x200, scoped, tag = 'scoped memory for tpu_custom_call.1']
  %s0 = inlined_call_operand.vmem [shape: f32[2,8,16], index: 0, kind: input, shape index: {}]
  %s1 = inlined_call_operand.hbm [shape: f32[2,8,16,256], index: 1, kind: input, shape index: {}]
  %s2 = inlined_call_operand.vmem [shape: f32[16,32], index: 2, kind: input, shape index: {}]
  %s3 = inlined_call_operand.vmem [shape: f32[1,32], index: 3, kind: input, shape index: {}]
  %s4 = inlined_call_operand.vmem [shape: f32[32,20], index: 4, kind: input, shape index: {}]
  %s5 = inlined_call_operand.vmem [shape: f32[1,20], index: 5, kind: input, shape index: {}]
  %s6 = inlined_call_operand.<no memory space> [shape: f32[1,1], index: 6, kind: input, shape index: {}]
  %s7 = inlined_call_operand.<no memory space> [shape: f32[1,1], index: 7, kind: input, shape index: {}]
  %s8 = inlined_call_operand.vmem [shape: f32[2,256], index: 8, kind: input, shape index: {}]
  %s9 = inlined_call_operand.vmem [shape: f32[1,2], index: 9, kind: input, shape index: {}]
  %s10 = inlined_call_operand.hbm [shape: f32[2,8,128], index: 10, kind: output, shape index: {}]
  %s11 = sld [smem:[#allocation0]]
  $region54: #{tpu_custom_call.1} parent=0
    _
  %s13 = ssub.s32 1, %s11
  %s14 = scalar_select 0, %s13, %s11
  %v15 = vstv %s6
  %16 = vst [vmem:[#allocation2] sm:$0x1] %v15
  %v17 = vstv %s7
  %18 = vst [vmem:[#allocation3] sm:$0x1] %v17
  $region1: #{tpu_custom_call.1} parent=0
    #allocation4 [shape = 'u8[262144]{0}', space=vmem, size = 0x40000, scoped, tag = 'input window, operand 1, single buffered']
    #allocation5 [shape = 's32[1]{0}', space=sflag, size = 0x4, scoped, tag = 'scoped memory for tpu_custom_call.1']
    #allocation6 [shape = 's32[1]{0}', space=sflag, size = 0x4, scoped, tag = 'scoped memory for tpu_custom_call.1']
    #allocation7 [shape = 'u8[8192]{0}', space=vmem, size = 0x2000, scoped, tag = 'output window, operand 0, single buffered']
    %19 = vsyncpa [#allocation5], 0
    %20 = vsyncpa [#allocation6], 0
    // Predicated region
    $region2: #{tpu_custom_call.1} parent=1 // pred_check
      _
    $region3: #{tpu_custom_call.1} parent=1 // pred_check_branch
      %22 = sbr.rel (0) target = $region5
    $region4: #{tpu_custom_call.1} parent=1 // pred_region
      _
    $region5: #{tpu_custom_call.1} parent=1 // pred_fallthru
      _
    // Predicated region
    $region6: #{tpu_custom_call.1} parent=1 // pred_check
      _
    $region7: #{tpu_custom_call.1} parent=1 // pred_check_branch
      %24 = sbr.rel (0) target = $region9
    $region8: #{tpu_custom_call.1} parent=1 // pred_region
      %s26 = ssub.s32 8192, 8192
      %27 = vsyncadd [#allocation5], %s26
      %s28 = sshll.u32 [#allocation4], 4
      %s29 = int_to_ptr.vmem [resolvable:$true] %s28
      %34 = dma.hbm_to_vmem [thread:$0]  %s1, 8192, %s29, [#allocation5], 256, 256, 16
    $region9: #{tpu_custom_call.1} parent=1 // pred_fallthru
      _
    // Predicated region
    $region10: #{tpu_custom_call.1} parent=1 // pred_check
      _
    $region11: #{tpu_custom_call.1} parent=1 // pred_check_branch
      %36 = sbr.rel (0) target = $region13
    $region12: #{tpu_custom_call.1} parent=1 // pred_region
      _
    $region13: #{tpu_custom_call.1} parent=1 // pred_fallthru
      _
    // Predicated region
    $region14: #{tpu_custom_call.1} parent=1 // pred_check
      _
    $region15: #{tpu_custom_call.1} parent=1 // pred_check_branch
      %38 = sbr.rel (0) target = $region17
    $region16: #{tpu_custom_call.1} parent=1 // pred_region
      _
    $region17: #{tpu_custom_call.1} parent=1 // pred_fallthru
      _
    // Predicated region
    $region18: #{tpu_custom_call.1} parent=1 // pred_check
      _
    $region19: #{tpu_custom_call.1} parent=1 // pred_check_branch
      %40 = sbr.rel (0) target = $region21
    $region20: #{tpu_custom_call.1} parent=1 // pred_region
      _
    $region21: #{tpu_custom_call.1} parent=1 // pred_fallthru
      _
    // Predicated region
    $region22: #{tpu_custom_call.1} parent=1 // pred_check
      _
    $region23: #{tpu_custom_call.1} parent=1 // pred_check_branch
      %42 = sbr.rel (0) target = $region25
    $region24: #{tpu_custom_call.1} parent=1 // pred_region
      _
    $region25: #{tpu_custom_call.1} parent=1 // pred_fallthru
      _
    // Predicated region
    $region26: #{tpu_custom_call.1} parent=1 // pred_check
      _
    $region27: #{tpu_custom_call.1} parent=1 // pred_check_branch
      %44 = sbr.rel (0) target = $region29
    $region28: #{tpu_custom_call.1} parent=1 // pred_region
      _
    $region29: #{tpu_custom_call.1} parent=1 // pred_fallthru
      _
    // Predicated region
    $region30: #{tpu_custom_call.1} parent=1 // pred_check
      _
    $region31: #{tpu_custom_call.1} parent=1 // pred_check_branch
      %46 = sbr.rel (0) target = $region33
    $region32: #{tpu_custom_call.1} parent=1 // pred_region
      _
    $region33: #{tpu_custom_call.1} parent=1 // pred_fallthru
      _
    // Predicated region
    $region34: #{tpu_custom_call.1} parent=1 // pred_check
      _
    $region35: #{tpu_custom_call.1} parent=1 // pred_check_branch
      %48 = sbr.rel (0) target = $region37
    $region36: #{tpu_custom_call.1} parent=1 // pred_region
      _
    $region37: #{tpu_custom_call.1} parent=1 // pred_fallthru
      _
    // Predicated region
    $region38: #{tpu_custom_call.1} parent=1 // pred_check
      _
    $region39: #{tpu_custom_call.1} parent=1 // pred_check_branch
      %50 = sbr.rel (0) target = $region41
    $region40: #{tpu_custom_call.1} parent=1 // pred_region
      _
    $region41: #{tpu_custom_call.1} parent=1 // pred_fallthru
      _
    // Predicated region
    $region42: #{tpu_custom_call.1} parent=1 // pred_check
      _
    $region43: #{tpu_custom_call.1} parent=1 // pred_check_branch
      %52 = sbr.rel (0) target = $region45
    $region44: #{tpu_custom_call.1} parent=1 // pred_region
      %53 = dma.done [#allocation5], 8192
    $region45: #{tpu_custom_call.1} parent=1 // pred_fallthru
      _
    %v54 = vld [vmem:[%s0] sm:$0xff]
    %v55 = vld [vmem:[%s0 + $0x8] sm:$0xff]
    %v56 = vld [vmem:[%s2] sm:$0xff]
    %v57 = vld [vmem:[%s2 + $0x8] sm:$0xff]
    %v58 = vld [vmem:[%s3] sm:$0x1]
    %v60 = vlaneseq
    %v61 = vshrl.u32 %v60, 7
    %v62 = vsub.s32 0, %v61
    %v63 = vrot.slane %v58, %v62
    %vm65 = vcmask 130048
    %v67 = vsel %vm65, %v54, 0
    %v70 = vsel %vm65, %v55, 0
    %72 = vmatprep.subr.mxu0 0.0
    %73 = vmatpush1.msra.mxu0 0.0
    %74 = vmatprep.subr.mxu0 0.0
    %75 = vmatpush1.msra.mxu0 0.0
    %76 = vmatprep.subr.mxu0 0.0
    %77 = vmatpush1.msra.mxu0 0.0
    %78 = vmatprep.subr.mxu0 0.0
    %79 = vmatpush1.msra.mxu0 0.0
    %80 = vmatprep.subr.mxu0 0.0
    %81 = vmatpush1.msra.mxu0 0.0
    %82 = vmatprep.subr.mxu0 0.0
    %83 = vmatpush1.msra.mxu0 0.0
    %84 = vmatprep.subr.mxu0 0.0
    %85 = vmatpush1.msra.mxu0 0.0
    %86 = vmatprep.subr.mxu0 0.0
    %87 = vmatpush1.msra.mxu0 0.0
    %88 = vmatprep.subr.mxu0 0.0
    %89 = vmatpush1.msra.mxu0 0.0
    %90 = vmatprep.subr.mxu0 0.0
    %91 = vmatpush1.msra.mxu0 0.0
    %92 = vmatprep.subr.mxu0 0.0
    %93 = vmatpush1.msra.mxu0 0.0
    %94 = vmatprep.subr.mxu0 0.0
    %95 = vmatpush1.msra.mxu0 0.0
    %96 = vmatprep.subr.mxu0 0.0
    %97 = vmatpush1.msra.mxu0 0.0
    %98 = vmatprep.subr.mxu0 0.0
    %99 = vmatpush1.msra.mxu0 0.0
    %100 = vmatprep.subr.mxu0 0.0
    %101 = vmatpush1.msra.mxu0 %v57
    %102 = vmatprep.subr.mxu0 0.0
    %103 = vmatpush1.msra.mxu0 %v56
    %104 = vmatprep.subr.mxu0 0.0
    %105 = vmatpush2.msra.mxu0 0.0
    %106 = vmatprep.subr.mxu0 0.0
    %107 = vmatpush2.msra.mxu0 0.0
    %108 = vmatprep.subr.mxu0 0.0
    %109 = vmatpush2.msra.mxu0 0.0
    %110 = vmatprep.subr.mxu0 0.0
    %111 = vmatpush2.msra.mxu0 0.0
    %112 = vmatprep.subr.mxu0 0.0
    %113 = vmatpush2.msra.mxu0 0.0
    %114 = vmatprep.subr.mxu0 0.0
    %115 = vmatpush2.msra.mxu0 0.0
    %116 = vmatprep.subr.mxu0 0.0
    %117 = vmatpush2.msra.mxu0 0.0
    %118 = vmatprep.subr.mxu0 0.0
    %119 = vmatpush2.msra.mxu0 0.0
    %120 = vmatprep.subr.mxu0 0.0
    %121 = vmatpush2.msra.mxu0 0.0
    %122 = vmatprep.subr.mxu0 0.0
    %123 = vmatpush2.msra.mxu0 0.0
    %124 = vmatprep.subr.mxu0 0.0
    %125 = vmatpush2.msra.mxu0 0.0
    %126 = vmatprep.subr.mxu0 0.0
    %127 = vmatpush2.msra.mxu0 0.0
    %128 = vmatprep.subr.mxu0 0.0
    %129 = vmatpush2.msra.mxu0 0.0
    %130 = vmatprep.subr.mxu0 0.0
    %131 = vmatpush2.msra.mxu0 0.0
    %132 = vmatprep.subr.mxu0 0.0
    %133 = vmatpush2.msra.mxu0 0.0
    %134 = vmatprep.subr.mxu0 0.0
    %135 = vmatpush2.msra.mxu0 0.0
    %136 = vmatprep.mubr.f32.mxu0 0.0
    %137 = vmatmul.mubr.f32.gmra.mxu0 %v67
    %v138 = vpop.f32.mrf.mxu0
    %v139 = vadd.f32 %v63, %v138
    %v140 = vpop.f32.mrf.mxu0
    %141 = vmatprep.mubr.f32.mxu0 0.0
    %142 = vmatmul.mubr.f32.gmra.mxu0 %v70
    %v143 = vpop.f32.mrf.mxu0
    %v144 = vadd.f32 %v63, %v143
    %v145 = vpop.f32.mrf.mxu0
    %146 = vdwg.mxu0
    %v147 = vld [vmem:[%s4] sm:$0xff]
    %v148 = vld [vmem:[%s4 + $0x8] sm:$0xff]
    %v149 = vld [vmem:[%s4 + $0x10] sm:$0xff]
    %v150 = vld [vmem:[%s4 + $0x18] sm:$0xff]
    %v151 = vld [vmem:[%s5] sm:$0x1]
    %v153 = vlaneseq
    %v154 = vshrl.u32 %v153, 7
    %v155 = vsub.s32 0, %v154
    %v156 = vrot.slane %v151, %v155
    %vm158 = vcmask 261120
    %v160 = vsel %vm158, %v139, 0
    %v163 = vsel %vm158, %v144, 0
    %165 = vmatprep.subr.mxu0 0.0
    %166 = vmatpush1.msra.mxu0 0.0
    %167 = vmatprep.subr.mxu0 0.0
    %168 = vmatpush1.msra.mxu0 0.0
    %169 = vmatprep.subr.mxu0 0.0
    %170 = vmatpush1.msra.mxu0 0.0
    %171 = vmatprep.subr.mxu0 0.0
    %172 = vmatpush1.msra.mxu0 0.0
    %173 = vmatprep.subr.mxu0 0.0
    %174 = vmatpush1.msra.mxu0 0.0
    %175 = vmatprep.subr.mxu0 0.0
    %176 = vmatpush1.msra.mxu0 0.0
    %177 = vmatprep.subr.mxu0 0.0
    %178 = vmatpush1.msra.mxu0 0.0
    %179 = vmatprep.subr.mxu0 0.0
    %180 = vmatpush1.msra.mxu0 0.0
    %181 = vmatprep.subr.mxu0 0.0
    %182 = vmatpush1.msra.mxu0 0.0
    %183 = vmatprep.subr.mxu0 0.0
    %184 = vmatpush1.msra.mxu0 0.0
    %185 = vmatprep.subr.mxu0 0.0
    %186 = vmatpush1.msra.mxu0 0.0
    %187 = vmatprep.subr.mxu0 0.0
    %188 = vmatpush1.msra.mxu0 0.0
    %189 = vmatprep.subr.mxu0 0.0
    %190 = vmatpush1.msra.mxu0 %v150
    %191 = vmatprep.subr.mxu0 0.0
    %192 = vmatpush1.msra.mxu0 %v149
    %193 = vmatprep.subr.mxu0 0.0
    %194 = vmatpush1.msra.mxu0 %v148
    %195 = vmatprep.subr.mxu0 0.0
    %196 = vmatpush1.msra.mxu0 %v147
    %197 = vmatprep.subr.mxu0 0.0
    %198 = vmatpush2.msra.mxu0 0.0
    %199 = vmatprep.subr.mxu0 0.0
    %200 = vmatpush2.msra.mxu0 0.0
    %201 = vmatprep.subr.mxu0 0.0
    %202 = vmatpush2.msra.mxu0 0.0
    %203 = vmatprep.subr.mxu0 0.0
    %204 = vmatpush2.msra.mxu0 0.0
    %205 = vmatprep.subr.mxu0 0.0
    %206 = vmatpush2.msra.mxu0 0.0
    %207 = vmatprep.subr.mxu0 0.0
    %208 = vmatpush2.msra.mxu0 0.0
    %209 = vmatprep.subr.mxu0 0.0
    %210 = vmatpush2.msra.mxu0 0.0
    %211 = vmatprep.subr.mxu0 0.0
    %212 = vmatpush2.msra.mxu0 0.0
    %213 = vmatprep.subr.mxu0 0.0
    %214 = vmatpush2.msra.mxu0 0.0
    %215 = vmatprep.subr.mxu0 0.0
    %216 = vmatpush2.msra.mxu0 0.0
    %217 = vmatprep.subr.mxu0 0.0
    %218 = vmatpush2.msra.mxu0 0.0
    %219 = vmatprep.subr.mxu0 0.0
    %220 = vmatpush2.msra.mxu0 0.0
    %221 = vmatprep.subr.mxu0 0.0
    %222 = vmatpush2.msra.mxu0 0.0
    %223 = vmatprep.subr.mxu0 0.0
    %224 = vmatpush2.msra.mxu0 0.0
    %225 = vmatprep.subr.mxu0 0.0
    %226 = vmatpush2.msra.mxu0 0.0
    %227 = vmatprep.subr.mxu0 0.0
    %228 = vmatpush2.msra.mxu0 0.0
    %229 = vmatprep.mubr.f32.mxu0 0.0
    %230 = vmatmul.mubr.f32.gmra.mxu0 %v160
    %v231 = vpop.f32.mrf.mxu0
    %v232 = vadd.f32 %v156, %v231
    %v233 = vpop.f32.mrf.mxu0
    %234 = vmatprep.mubr.f32.mxu0 0.0
    %235 = vmatmul.mubr.f32.gmra.mxu0 %v163
    %v236 = vpop.f32.mrf.mxu0
    %v237 = vadd.f32 %v156, %v236
    %v238 = vpop.f32.mrf.mxu0
    %239 = vdwg.mxu0
    %v240 = vsel %vm65, %v232, -inf
    %241 = vmax.xlane.f32.xlu0 %v240
    %v242 = vpop.xlane.xlu0 %241
    %v243 = vsel %vm65, %v237, -inf
    %244 = vmax.xlane.f32.xlu0 %v243
    %v245 = vpop.xlane.xlu0 %244
    %v246 = vsub.f32 %v232, %v242
    %v247 = vsub.f32 %v237, %v245
    %v248 = vmul.f32 %v246, 1.442695
    %v249 = vpow.pop %v248
    %v250 = vmul.f32 %v247, 1.442695
    %v251 = vpow.pop %v250
    %v252 = vsel %vm65, %v249, 0.0
    %253 = vadd.xlane.f32.xlu0 %v252
    %v254 = vpop.xlane.xlu0 %253
    %v255 = vsel %vm65, %v251, 0.0
    %256 = vadd.xlane.f32.xlu0 %v255
    %v257 = vpop.xlane.xlu0 %256
    %v258 = vrcp.pop %v254
    %v259 = vmul.f32 %v249, %v258
    %v260 = vrcp.pop %v257
    %v261 = vmul.f32 %v251, %v260
    %v262 = vld [vmem:[#allocation4] sm:$0xff]
    %v263 = vld [vmem:[#allocation4 + $0x8] sm:$0xff]
    %v264 = vld [vmem:[#allocation4 + $0x10] sm:$0xff]
    %v265 = vld [vmem:[#allocation4 + $0x18] sm:$0xff]
    %v266 = vld [vmem:[#allocation4 + $0x20] sm:$0xff]
    %v267 = vld [vmem:[#allocation4 + $0x28] sm:$0xff]
    %v268 = vld [vmem:[#allocation4 + $0x30] sm:$0xff]
    %v269 = vld [vmem:[#allocation4 + $0x38] sm:$0xff]
    %v270 = vld [vmem:[#allocation4 + $0x40] sm:$0xff]
    %v271 = vld [vmem:[#allocation4 + $0x48] sm:$0xff]
    %v272 = vld [vmem:[#allocation4 + $0x50] sm:$0xff]
    %v273 = vld [vmem:[#allocation4 + $0x58] sm:$0xff]
    %v274 = vld [vmem:[#allocation4 + $0x60] sm:$0xff]
    %v275 = vld [vmem:[#allocation4 + $0x68] sm:$0xff]
    %v276 = vld [vmem:[#allocation4 + $0x70] sm:$0xff]
    %v277 = vld [vmem:[#allocation4 + $0x78] sm:$0xff]
    %v278 = vld [vmem:[#allocation4 + $0x80] sm:$0xff]
    %v279 = vld [vmem:[#allocation4 + $0x88] sm:$0xff]
    %v280 = vld [vmem:[#allocation4 + $0x90] sm:$0xff]
    %v281 = vld [vmem:[#allocation4 + $0x98] sm:$0xff]
    %v282 = vld [vmem:[#allocation4 + $0xa0] sm:$0xff]
    %v283 = vld [vmem:[#allocation4 + $0xa8] sm:$0xff]
    %v284 = vld [vmem:[#allocation4 + $0xb0] sm:$0xff]
    %v285 = vld [vmem:[#allocation4 + $0xb8] sm:$0xff]
    %v286 = vld [vmem:[#allocation4 + $0xc0] sm:$0xff]
    %v287 = vld [vmem:[#allocation4 + $0xc8] sm:$0xff]
    %v288 = vld [vmem:[#allocation4 + $0xd0] sm:$0xff]
    %v289 = vld [vmem:[#allocation4 + $0xd8] sm:$0xff]
    %v290 = vld [vmem:[#allocation4 + $0xe0] sm:$0xff]
    %v291 = vld [vmem:[#allocation4 + $0xe8] sm:$0xff]
    %v292 = vld [vmem:[#allocation4 + $0xf0] sm:$0xff]
    %v293 = vld [vmem:[#allocation4 + $0xf8] sm:$0xff]
    %v294 = vld [vmem:[#allocation4 + $0x100] sm:$0xff]
    %v295 = vld [vmem:[#allocation4 + $0x108] sm:$0xff]
    %v296 = vld [vmem:[#allocation4 + $0x110] sm:$0xff]
    %v297 = vld [vmem:[#allocation4 + $0x118] sm:$0xff]
    %v298 = vld [vmem:[#allocation4 + $0x120] sm:$0xff]
    %v299 = vld [vmem:[#allocation4 + $0x128] sm:$0xff]
    %v300 = vld [vmem:[#allocation4 + $0x130] sm:$0xff]
    %v301 = vld [vmem:[#allocation4 + $0x138] sm:$0xff]
    %v302 = vld [vmem:[#allocation4 + $0x140] sm:$0xff]
    %v303 = vld [vmem:[#allocation4 + $0x148] sm:$0xff]
    %v304 = vld [vmem:[#allocation4 + $0x150] sm:$0xff]
    %v305 = vld [vmem:[#allocation4 + $0x158] sm:$0xff]
    %v306 = vld [vmem:[#allocation4 + $0x160] sm:$0xff]
    %v307 = vld [vmem:[#allocation4 + $0x168] sm:$0xff]
    %v308 = vld [vmem:[#allocation4 + $0x170] sm:$0xff]
    %v309 = vld [vmem:[#allocation4 + $0x178] sm:$0xff]
    %v310 = vld [vmem:[#allocation4 + $0x180] sm:$0xff]
    %v311 = vld [vmem:[#allocation4 + $0x188] sm:$0xff]
    %v312 = vld [vmem:[#allocation4 + $0x190] sm:$0xff]
    %v313 = vld [vmem:[#allocation4 + $0x198] sm:$0xff]
    %v314 = vld [vmem:[#allocation4 + $0x1a0] sm:$0xff]
    %v315 = vld [vmem:[#allocation4 + $0x1a8] sm:$0xff]
    %v316 = vld [vmem:[#allocation4 + $0x1b0] sm:$0xff]
    %v317 = vld [vmem:[#allocation4 + $0x1b8] sm:$0xff]
    %v318 = vld [vmem:[#allocation4 + $0x1c0] sm:$0xff]
    %v319 = vld [vmem:[#allocation4 + $0x1c8] sm:$0xff]
    %v320 = vld [vmem:[#allocation4 + $0x1d0] sm:$0xff]
    %v321 = vld [vmem:[#allocation4 + $0x1d8] sm:$0xff]
    %v322 = vld [vmem:[#allocation4 + $0x1e0] sm:$0xff]
    %v323 = vld [vmem:[#allocation4 + $0x1e8] sm:$0xff]
    %v324 = vld [vmem:[#allocation4 + $0x1f0] sm:$0xff]
    %v325 = vld [vmem:[#allocation4 + $0x1f8] sm:$0xff]
    %v326 = vadd.f32 %v262, %v263
    %327 = vadd.xlane.f32.xlu0 %v326
    %v328 = vpop.xlane.xlu0 %327
    %v329 = vadd.f32 %v264, %v265
    %330 = vadd.xlane.f32.xlu0 %v329
    %v331 = vpop.xlane.xlu0 %330
    %v332 = vadd.f32 %v266, %v267
    %333 = vadd.xlane.f32.xlu0 %v332
    %v334 = vpop.xlane.xlu0 %333
    %v335 = vadd.f32 %v268, %v269
    %336 = vadd.xlane.f32.xlu0 %v335
    %v337 = vpop.xlane.xlu0 %336
    %v338 = vadd.f32 %v270, %v271
    %339 = vadd.xlane.f32.xlu0 %v338
    %v340 = vpop.xlane.xlu0 %339
    %v341 = vadd.f32 %v272, %v273
    %342 = vadd.xlane.f32.xlu0 %v341
    %v343 = vpop.xlane.xlu0 %342
    %v344 = vadd.f32 %v274, %v275
    %345 = vadd.xlane.f32.xlu0 %v344
    %v346 = vpop.xlane.xlu0 %345
    %v347 = vadd.f32 %v276, %v277
    %348 = vadd.xlane.f32.xlu0 %v347
    %v349 = vpop.xlane.xlu0 %348
    %v350 = vadd.f32 %v278, %v279
    %351 = vadd.xlane.f32.xlu0 %v350
    %v352 = vpop.xlane.xlu0 %351
    %v353 = vadd.f32 %v280, %v281
    %354 = vadd.xlane.f32.xlu0 %v353
    %v355 = vpop.xlane.xlu0 %354
    %v356 = vadd.f32 %v282, %v283
    %357 = vadd.xlane.f32.xlu0 %v356
    %v358 = vpop.xlane.xlu0 %357
    %v359 = vadd.f32 %v284, %v285
    %360 = vadd.xlane.f32.xlu0 %v359
    %v361 = vpop.xlane.xlu0 %360
    %v362 = vadd.f32 %v286, %v287
    %363 = vadd.xlane.f32.xlu0 %v362
    %v364 = vpop.xlane.xlu0 %363
    %v365 = vadd.f32 %v288, %v289
    %366 = vadd.xlane.f32.xlu0 %v365
    %v367 = vpop.xlane.xlu0 %366
    %v368 = vadd.f32 %v290, %v291
    %369 = vadd.xlane.f32.xlu0 %v368
    %v370 = vpop.xlane.xlu0 %369
    %v371 = vadd.f32 %v292, %v293
    %372 = vadd.xlane.f32.xlu0 %v371
    %v373 = vpop.xlane.xlu0 %372
    %v374 = vadd.f32 %v294, %v295
    %375 = vadd.xlane.f32.xlu0 %v374
    %v376 = vpop.xlane.xlu0 %375
    %v377 = vadd.f32 %v296, %v297
    %378 = vadd.xlane.f32.xlu0 %v377
    %v379 = vpop.xlane.xlu0 %378
    %v380 = vadd.f32 %v298, %v299
    %381 = vadd.xlane.f32.xlu0 %v380
    %v382 = vpop.xlane.xlu0 %381
    %v383 = vadd.f32 %v300, %v301
    %384 = vadd.xlane.f32.xlu0 %v383
    %v385 = vpop.xlane.xlu0 %384
    %v386 = vadd.f32 %v302, %v303
    %387 = vadd.xlane.f32.xlu0 %v386
    %v388 = vpop.xlane.xlu0 %387
    %v389 = vadd.f32 %v304, %v305
    %390 = vadd.xlane.f32.xlu0 %v389
    %v391 = vpop.xlane.xlu0 %390
    %v392 = vadd.f32 %v306, %v307
    %393 = vadd.xlane.f32.xlu0 %v392
    %v394 = vpop.xlane.xlu0 %393
    %v395 = vadd.f32 %v308, %v309
    %396 = vadd.xlane.f32.xlu0 %v395
    %v397 = vpop.xlane.xlu0 %396
    %v398 = vadd.f32 %v310, %v311
    %399 = vadd.xlane.f32.xlu0 %v398
    %v400 = vpop.xlane.xlu0 %399
    %v401 = vadd.f32 %v312, %v313
    %402 = vadd.xlane.f32.xlu0 %v401
    %v403 = vpop.xlane.xlu0 %402
    %v404 = vadd.f32 %v314, %v315
    %405 = vadd.xlane.f32.xlu0 %v404
    %v406 = vpop.xlane.xlu0 %405
    %v407 = vadd.f32 %v316, %v317
    %408 = vadd.xlane.f32.xlu0 %v407
    %v409 = vpop.xlane.xlu0 %408
    %v410 = vadd.f32 %v318, %v319
    %411 = vadd.xlane.f32.xlu0 %v410
    %v412 = vpop.xlane.xlu0 %411
    %v413 = vadd.f32 %v320, %v321
    %414 = vadd.xlane.f32.xlu0 %v413
    %v415 = vpop.xlane.xlu0 %414
    %v416 = vadd.f32 %v322, %v323
    %417 = vadd.xlane.f32.xlu0 %v416
    %v418 = vpop.xlane.xlu0 %417
    %v419 = vadd.f32 %v324, %v325
    %420 = vadd.xlane.f32.xlu0 %v419
    %v421 = vpop.xlane.xlu0 %420
    %v422 = vadd.f32 %v328, %v331
    %v423 = vrot.slane %v422, 4
    %v424 = vadd.f32 %v422, %v423
    %v425 = vrot.slane %v424, 2
    %v426 = vadd.f32 %v424, %v425
    %v427 = vrot.slane %v426, 1
    %v428 = vadd.f32 %v426, %v427
    %v429 = vadd.f32 %v334, %v337
    %v430 = vrot.slane %v429, 4
    %v431 = vadd.f32 %v429, %v430
    %v432 = vrot.slane %v431, 2
    %v433 = vadd.f32 %v431, %v432
    %v434 = vrot.slane %v433, 1
    %v435 = vadd.f32 %v433, %v434
    %v436 = vadd.f32 %v340, %v343
    %v437 = vrot.slane %v436, 4
    %v438 = vadd.f32 %v436, %v437
    %v439 = vrot.slane %v438, 2
    %v440 = vadd.f32 %v438, %v439
    %v441 = vrot.slane %v440, 1
    %v442 = vadd.f32 %v440, %v441
    %v443 = vadd.f32 %v346, %v349
    %v444 = vrot.slane %v443, 4
    %v445 = vadd.f32 %v443, %v444
    %v446 = vrot.slane %v445, 2
    %v447 = vadd.f32 %v445, %v446
    %v448 = vrot.slane %v447, 1
    %v449 = vadd.f32 %v447, %v448
    %v450 = vadd.f32 %v352, %v355
    %v451 = vrot.slane %v450, 4
    %v452 = vadd.f32 %v450, %v451
    %v453 = vrot.slane %v452, 2
    %v454 = vadd.f32 %v452, %v453
    %v455 = vrot.slane %v454, 1
    %v456 = vadd.f32 %v454, %v455
    %v457 = vadd.f32 %v358, %v361
    %v458 = vrot.slane %v457, 4
    %v459 = vadd.f32 %v457, %v458
    %v460 = vrot.slane %v459, 2
    %v461 = vadd.f32 %v459, %v460
    %v462 = vrot.slane %v461, 1
    %v463 = vadd.f32 %v461, %v462
    %v464 = vadd.f32 %v364, %v367
    %v465 = vrot.slane %v464, 4
    %v466 = vadd.f32 %v464, %v465
    %v467 = vrot.slane %v466, 2
    %v468 = vadd.f32 %v466, %v467
    %v469 = vrot.slane %v468, 1
    %v470 = vadd.f32 %v468, %v469
    %v471 = vadd.f32 %v370, %v373
    %v472 = vrot.slane %v471, 4
    %v473 = vadd.f32 %v471, %v472
    %v474 = vrot.slane %v473, 2
    %v475 = vadd.f32 %v473, %v474
    %v476 = vrot.slane %v475, 1
    %v477 = vadd.f32 %v475, %v476
    %v478 = vadd.f32 %v376, %v379
    %v479 = vrot.slane %v478, 4
    %v480 = vadd.f32 %v478, %v479
    %v481 = vrot.slane %v480, 2
    %v482 = vadd.f32 %v480, %v481
    %v483 = vrot.slane %v482, 1
    %v484 = vadd.f32 %v482, %v483
    %v485 = vadd.f32 %v382, %v385
    %v486 = vrot.slane %v485, 4
    %v487 = vadd.f32 %v485, %v486
    %v488 = vrot.slane %v487, 2
    %v489 = vadd.f32 %v487, %v488
    %v490 = vrot.slane %v489, 1
    %v491 = vadd.f32 %v489, %v490
    %v492 = vadd.f32 %v388, %v391
    %v493 = vrot.slane %v492, 4
    %v494 = vadd.f32 %v492, %v493
    %v495 = vrot.slane %v494, 2
    %v496 = vadd.f32 %v494, %v495
    %v497 = vrot.slane %v496, 1
    %v498 = vadd.f32 %v496, %v497
    %v499 = vadd.f32 %v394, %v397
    %v500 = vrot.slane %v499, 4
    %v501 = vadd.f32 %v499, %v500
    %v502 = vrot.slane %v501, 2
    %v503 = vadd.f32 %v501, %v502
    %v504 = vrot.slane %v503, 1
    %v505 = vadd.f32 %v503, %v504
    %v506 = vadd.f32 %v400, %v403
    %v507 = vrot.slane %v506, 4
    %v508 = vadd.f32 %v506, %v507
    %v509 = vrot.slane %v508, 2
    %v510 = vadd.f32 %v508, %v509
    %v511 = vrot.slane %v510, 1
    %v512 = vadd.f32 %v510, %v511
    %v513 = vadd.f32 %v406, %v409
    %v514 = vrot.slane %v513, 4
    %v515 = vadd.f32 %v513, %v514
    %v516 = vrot.slane %v515, 2
    %v517 = vadd.f32 %v515, %v516
    %v518 = vrot.slane %v517, 1
    %v519 = vadd.f32 %v517, %v518
    %v520 = vadd.f32 %v412, %v415
    %v521 = vrot.slane %v520, 4
    %v522 = vadd.f32 %v520, %v521
    %v523 = vrot.slane %v522, 2
    %v524 = vadd.f32 %v522, %v523
    %v525 = vrot.slane %v524, 1
    %v526 = vadd.f32 %v524, %v525
    %v527 = vadd.f32 %v418, %v421
    %v528 = vrot.slane %v527, 4
    %v529 = vadd.f32 %v527, %v528
    %v530 = vrot.slane %v529, 2
    %v531 = vadd.f32 %v529, %v530
    %v532 = vrot.slane %v531, 1
    %v533 = vadd.f32 %v531, %v532
    %v534 = vmul.f32 %v262, %v262
    %v535 = vmul.f32 %v263, %v263
    %v536 = vmul.f32 %v264, %v264
    %v537 = vmul.f32 %v265, %v265
    %v538 = vmul.f32 %v266, %v266
    %v539 = vmul.f32 %v267, %v267
    %v540 = vmul.f32 %v268, %v268
    %v541 = vmul.f32 %v269, %v269
    %v542 = vmul.f32 %v270, %v270
    %v543 = vmul.f32 %v271, %v271
    %v544 = vmul.f32 %v272, %v272
    %v545 = vmul.f32 %v273, %v273
    %v546 = vmul.f32 %v274, %v274
    %v547 = vmul.f32 %v275, %v275
    %v548 = vmul.f32 %v276, %v276
    %v549 = vmul.f32 %v277, %v277
    %v550 = vmul.f32 %v278, %v278
    %v551 = vmul.f32 %v279, %v279
    %v552 = vmul.f32 %v280, %v280
    %v553 = vmul.f32 %v281, %v281
    %v554 = vmul.f32 %v282, %v282
    %v555 = vmul.f32 %v283, %v283
    %v556 = vmul.f32 %v284, %v284
    %v557 = vmul.f32 %v285, %v285
    %v558 = vmul.f32 %v286, %v286
    %v559 = vmul.f32 %v287, %v287
    %v560 = vmul.f32 %v288, %v288
    %v561 = vmul.f32 %v289, %v289
    %v562 = vmul.f32 %v290, %v290
    %v563 = vmul.f32 %v291, %v291
    %v564 = vmul.f32 %v292, %v292
    %v565 = vmul.f32 %v293, %v293
    %v566 = vmul.f32 %v294, %v294
    %v567 = vmul.f32 %v295, %v295
    %v568 = vmul.f32 %v296, %v296
    %v569 = vmul.f32 %v297, %v297
    %v570 = vmul.f32 %v298, %v298
    %v571 = vmul.f32 %v299, %v299
    %v572 = vmul.f32 %v300, %v300
    %v573 = vmul.f32 %v301, %v301
    %v574 = vmul.f32 %v302, %v302
    %v575 = vmul.f32 %v303, %v303
    %v576 = vmul.f32 %v304, %v304
    %v577 = vmul.f32 %v305, %v305
    %v578 = vmul.f32 %v306, %v306
    %v579 = vmul.f32 %v307, %v307
    %v580 = vmul.f32 %v308, %v308
    %v581 = vmul.f32 %v309, %v309
    %v582 = vmul.f32 %v310, %v310
    %v583 = vmul.f32 %v311, %v311
    %v584 = vmul.f32 %v312, %v312
    %v585 = vmul.f32 %v313, %v313
    %v586 = vmul.f32 %v314, %v314
    %v587 = vmul.f32 %v315, %v315
    %v588 = vmul.f32 %v316, %v316
    %v589 = vmul.f32 %v317, %v317
    %v590 = vmul.f32 %v318, %v318
    %v591 = vmul.f32 %v319, %v319
    %v592 = vmul.f32 %v320, %v320
    %v593 = vmul.f32 %v321, %v321
    %v594 = vmul.f32 %v322, %v322
    %v595 = vmul.f32 %v323, %v323
    %v596 = vmul.f32 %v324, %v324
    %v597 = vmul.f32 %v325, %v325
    %v598 = vadd.f32 %v534, %v535
    %599 = vadd.xlane.f32.xlu0 %v598
    %v600 = vpop.xlane.xlu0 %599
    %v601 = vadd.f32 %v536, %v537
    %602 = vadd.xlane.f32.xlu0 %v601
    %v603 = vpop.xlane.xlu0 %602
    %v604 = vadd.f32 %v538, %v539
    %605 = vadd.xlane.f32.xlu0 %v604
    %v606 = vpop.xlane.xlu0 %605
    %v607 = vadd.f32 %v540, %v541
    %608 = vadd.xlane.f32.xlu0 %v607
    %v609 = vpop.xlane.xlu0 %608
    %v610 = vadd.f32 %v542, %v543
    %611 = vadd.xlane.f32.xlu0 %v610
    %v612 = vpop.xlane.xlu0 %611
    %v613 = vadd.f32 %v544, %v545
    %614 = vadd.xlane.f32.xlu0 %v613
    %v615 = vpop.xlane.xlu0 %614
    %v616 = vadd.f32 %v546, %v547
    %617 = vadd.xlane.f32.xlu0 %v616
    %v618 = vpop.xlane.xlu0 %617
    %v619 = vadd.f32 %v548, %v549
    %620 = vadd.xlane.f32.xlu0 %v619
    %v621 = vpop.xlane.xlu0 %620
    %v622 = vadd.f32 %v550, %v551
    %623 = vadd.xlane.f32.xlu0 %v622
    %v624 = vpop.xlane.xlu0 %623
    %v625 = vadd.f32 %v552, %v553
    %626 = vadd.xlane.f32.xlu0 %v625
    %v627 = vpop.xlane.xlu0 %626
    %v628 = vadd.f32 %v554, %v555
    %629 = vadd.xlane.f32.xlu0 %v628
    %v630 = vpop.xlane.xlu0 %629
    %v631 = vadd.f32 %v556, %v557
    %632 = vadd.xlane.f32.xlu0 %v631
    %v633 = vpop.xlane.xlu0 %632
    %v634 = vadd.f32 %v558, %v559
    %635 = vadd.xlane.f32.xlu0 %v634
    %v636 = vpop.xlane.xlu0 %635
    %v637 = vadd.f32 %v560, %v561
    %638 = vadd.xlane.f32.xlu0 %v637
    %v639 = vpop.xlane.xlu0 %638
    %v640 = vadd.f32 %v562, %v563
    %641 = vadd.xlane.f32.xlu0 %v640
    %v642 = vpop.xlane.xlu0 %641
    %v643 = vadd.f32 %v564, %v565
    %644 = vadd.xlane.f32.xlu0 %v643
    %v645 = vpop.xlane.xlu0 %644
    %v646 = vadd.f32 %v566, %v567
    %647 = vadd.xlane.f32.xlu0 %v646
    %v648 = vpop.xlane.xlu0 %647
    %v649 = vadd.f32 %v568, %v569
    %650 = vadd.xlane.f32.xlu0 %v649
    %v651 = vpop.xlane.xlu0 %650
    %v652 = vadd.f32 %v570, %v571
    %653 = vadd.xlane.f32.xlu0 %v652
    %v654 = vpop.xlane.xlu0 %653
    %v655 = vadd.f32 %v572, %v573
    %656 = vadd.xlane.f32.xlu0 %v655
    %v657 = vpop.xlane.xlu0 %656
    %v658 = vadd.f32 %v574, %v575
    %659 = vadd.xlane.f32.xlu0 %v658
    %v660 = vpop.xlane.xlu0 %659
    %v661 = vadd.f32 %v576, %v577
    %662 = vadd.xlane.f32.xlu0 %v661
    %v663 = vpop.xlane.xlu0 %662
    %v664 = vadd.f32 %v578, %v579
    %665 = vadd.xlane.f32.xlu0 %v664
    %v666 = vpop.xlane.xlu0 %665
    %v667 = vadd.f32 %v580, %v581
    %668 = vadd.xlane.f32.xlu0 %v667
    %v669 = vpop.xlane.xlu0 %668
    %v670 = vadd.f32 %v582, %v583
    %671 = vadd.xlane.f32.xlu0 %v670
    %v672 = vpop.xlane.xlu0 %671
    %v673 = vadd.f32 %v584, %v585
    %674 = vadd.xlane.f32.xlu0 %v673
    %v675 = vpop.xlane.xlu0 %674
    %v676 = vadd.f32 %v586, %v587
    %677 = vadd.xlane.f32.xlu0 %v676
    %v678 = vpop.xlane.xlu0 %677
    %v679 = vadd.f32 %v588, %v589
    %680 = vadd.xlane.f32.xlu0 %v679
    %v681 = vpop.xlane.xlu0 %680
    %v682 = vadd.f32 %v590, %v591
    %683 = vadd.xlane.f32.xlu0 %v682
    %v684 = vpop.xlane.xlu0 %683
    %v685 = vadd.f32 %v592, %v593
    %686 = vadd.xlane.f32.xlu0 %v685
    %v687 = vpop.xlane.xlu0 %686
    %v688 = vadd.f32 %v594, %v595
    %689 = vadd.xlane.f32.xlu0 %v688
    %v690 = vpop.xlane.xlu0 %689
    %v691 = vadd.f32 %v596, %v597
    %692 = vadd.xlane.f32.xlu0 %v691
    %v693 = vpop.xlane.xlu0 %692
    %v694 = vadd.f32 %v600, %v603
    %v695 = vrot.slane %v694, 4
    %v696 = vadd.f32 %v694, %v695
    %v697 = vrot.slane %v696, 2
    %v698 = vadd.f32 %v696, %v697
    %v699 = vrot.slane %v698, 1
    %v700 = vadd.f32 %v698, %v699
    %v701 = vadd.f32 %v606, %v609
    %v702 = vrot.slane %v701, 4
    %v703 = vadd.f32 %v701, %v702
    %v704 = vrot.slane %v703, 2
    %v705 = vadd.f32 %v703, %v704
    %v706 = vrot.slane %v705, 1
    %v707 = vadd.f32 %v705, %v706
    %v708 = vadd.f32 %v612, %v615
    %v709 = vrot.slane %v708, 4
    %v710 = vadd.f32 %v708, %v709
    %v711 = vrot.slane %v710, 2
    %v712 = vadd.f32 %v710, %v711
    %v713 = vrot.slane %v712, 1
    %v714 = vadd.f32 %v712, %v713
    %v715 = vadd.f32 %v618, %v621
    %v716 = vrot.slane %v715, 4
    %v717 = vadd.f32 %v715, %v716
    %v718 = vrot.slane %v717, 2
    %v719 = vadd.f32 %v717, %v718
    %v720 = vrot.slane %v719, 1
    %v721 = vadd.f32 %v719, %v720
    %v722 = vadd.f32 %v624, %v627
    %v723 = vrot.slane %v722, 4
    %v724 = vadd.f32 %v722, %v723
    %v725 = vrot.slane %v724, 2
    %v726 = vadd.f32 %v724, %v725
    %v727 = vrot.slane %v726, 1
    %v728 = vadd.f32 %v726, %v727
    %v729 = vadd.f32 %v630, %v633
    %v730 = vrot.slane %v729, 4
    %v731 = vadd.f32 %v729, %v730
    %v732 = vrot.slane %v731, 2
    %v733 = vadd.f32 %v731, %v732
    %v734 = vrot.slane %v733, 1
    %v735 = vadd.f32 %v733, %v734
    %v736 = vadd.f32 %v636, %v639
    %v737 = vrot.slane %v736, 4
    %v738 = vadd.f32 %v736, %v737
    %v739 = vrot.slane %v738, 2
    %v740 = vadd.f32 %v738, %v739
    %v741 = vrot.slane %v740, 1
    %v742 = vadd.f32 %v740, %v741
    %v743 = vadd.f32 %v642, %v645
    %v744 = vrot.slane %v743, 4
    %v745 = vadd.f32 %v743, %v744
    %v746 = vrot.slane %v745, 2
    %v747 = vadd.f32 %v745, %v746
    %v748 = vrot.slane %v747, 1
    %v749 = vadd.f32 %v747, %v748
    %v750 = vadd.f32 %v648, %v651
    %v751 = vrot.slane %v750, 4
    %v752 = vadd.f32 %v750, %v751
    %v753 = vrot.slane %v752, 2
    %v754 = vadd.f32 %v752, %v753
    %v755 = vrot.slane %v754, 1
    %v756 = vadd.f32 %v754, %v755
    %v757 = vadd.f32 %v654, %v657
    %v758 = vrot.slane %v757, 4
    %v759 = vadd.f32 %v757, %v758
    %v760 = vrot.slane %v759, 2
    %v761 = vadd.f32 %v759, %v760
    %v762 = vrot.slane %v761, 1
    %v763 = vadd.f32 %v761, %v762
    %v764 = vadd.f32 %v660, %v663
    %v765 = vrot.slane %v764, 4
    %v766 = vadd.f32 %v764, %v765
    %v767 = vrot.slane %v766, 2
    %v768 = vadd.f32 %v766, %v767
    %v769 = vrot.slane %v768, 1
    %v770 = vadd.f32 %v768, %v769
    %v771 = vadd.f32 %v666, %v669
    %v772 = vrot.slane %v771, 4
    %v773 = vadd.f32 %v771, %v772
    %v774 = vrot.slane %v773, 2
    %v775 = vadd.f32 %v773, %v774
    %v776 = vrot.slane %v775, 1
    %v777 = vadd.f32 %v775, %v776
    %v778 = vadd.f32 %v672, %v675
    %v779 = vrot.slane %v778, 4
    %v780 = vadd.f32 %v778, %v779
    %v781 = vrot.slane %v780, 2
    %v782 = vadd.f32 %v780, %v781
    %v783 = vrot.slane %v782, 1
    %v784 = vadd.f32 %v782, %v783
    %v785 = vadd.f32 %v678, %v681
    %v786 = vrot.slane %v785, 4
    %v787 = vadd.f32 %v785, %v786
    %v788 = vrot.slane %v787, 2
    %v789 = vadd.f32 %v787, %v788
    %v790 = vrot.slane %v789, 1
    %v791 = vadd.f32 %v789, %v790
    %v792 = vadd.f32 %v684, %v687
    %v793 = vrot.slane %v792, 4
    %v794 = vadd.f32 %v792, %v793
    %v795 = vrot.slane %v794, 2
    %v796 = vadd.f32 %v794, %v795
    %v797 = vrot.slane %v796, 1
    %v798 = vadd.f32 %v796, %v797
    %v799 = vadd.f32 %v690, %v693
    %v800 = vrot.slane %v799, 4
    %v801 = vadd.f32 %v799, %v800
    %v802 = vrot.slane %v801, 2
    %v803 = vadd.f32 %v801, %v802
    %v804 = vrot.slane %v803, 1
    %v805 = vadd.f32 %v803, %v804
    %v806 = vmul.f32 %v428, 0.00043402778
    %v807 = vmul.f32 %v435, 0.00043402778
    %v808 = vmul.f32 %v442, 0.00043402778
    %v809 = vmul.f32 %v449, 0.00043402778
    %v810 = vmul.f32 %v456, 0.00043402778
    %v811 = vmul.f32 %v463, 0.00043402778
    %v812 = vmul.f32 %v470, 0.00043402778
    %v813 = vmul.f32 %v477, 0.00043402778
    %v814 = vmul.f32 %v484, 0.00043402778
    %v815 = vmul.f32 %v491, 0.00043402778
    %v816 = vmul.f32 %v498, 0.00043402778
    %v817 = vmul.f32 %v505, 0.00043402778
    %v818 = vmul.f32 %v512, 0.00043402778
    %v819 = vmul.f32 %v519, 0.00043402778
    %v820 = vmul.f32 %v526, 0.00043402778
    %v821 = vmul.f32 %v533, 0.00043402778
    %v822 = vmul.f32 %v700, 0.00043402778
    %v823 = vmul.f32 %v707, 0.00043402778
    %v824 = vmul.f32 %v714, 0.00043402778
    %v825 = vmul.f32 %v721, 0.00043402778
    %v826 = vmul.f32 %v728, 0.00043402778
    %v827 = vmul.f32 %v735, 0.00043402778
    %v828 = vmul.f32 %v742, 0.00043402778
    %v829 = vmul.f32 %v749, 0.00043402778
    %v830 = vmul.f32 %v756, 0.00043402778
    %v831 = vmul.f32 %v763, 0.00043402778
    %v832 = vmul.f32 %v770, 0.00043402778
    %v833 = vmul.f32 %v777, 0.00043402778
    %v834 = vmul.f32 %v784, 0.00043402778
    %v835 = vmul.f32 %v791, 0.00043402778
    %v836 = vmul.f32 %v798, 0.00043402778
    %v837 = vmul.f32 %v805, 0.00043402778
    %v838 = vmul.f32 %v806, %v806
    %v839 = vmul.f32 %v807, %v807
    %v840 = vmul.f32 %v808, %v808
    %v841 = vmul.f32 %v809, %v809
    %v842 = vmul.f32 %v810, %v810
    %v843 = vmul.f32 %v811, %v811
    %v844 = vmul.f32 %v812, %v812
    %v845 = vmul.f32 %v813, %v813
    %v846 = vmul.f32 %v814, %v814
    %v847 = vmul.f32 %v815, %v815
    %v848 = vmul.f32 %v816, %v816
    %v849 = vmul.f32 %v817, %v817
    %v850 = vmul.f32 %v818, %v818
    %v851 = vmul.f32 %v819, %v819
    %v852 = vmul.f32 %v820, %v820
    %v853 = vmul.f32 %v821, %v821
    %v854 = vsub.f32 %v822, %v838
    %v855 = vsub.f32 %v823, %v839
    %v856 = vsub.f32 %v824, %v840
    %v857 = vsub.f32 %v825, %v841
    %v858 = vsub.f32 %v826, %v842
    %v859 = vsub.f32 %v827, %v843
    %v860 = vsub.f32 %v828, %v844
    %v861 = vsub.f32 %v829, %v845
    %v862 = vsub.f32 %v830, %v846
    %v863 = vsub.f32 %v831, %v847
    %v864 = vsub.f32 %v832, %v848
    %v865 = vsub.f32 %v833, %v849
    %v866 = vsub.f32 %v834, %v850
    %v867 = vsub.f32 %v835, %v851
    %v868 = vsub.f32 %v836, %v852
    %v869 = vsub.f32 %v837, %v853
    %v870 = vadd.f32 %v854, 1e-05
    %v871 = vadd.f32 %v855, 1e-05
    %v872 = vadd.f32 %v856, 1e-05
    %v873 = vadd.f32 %v857, 1e-05
    %v874 = vadd.f32 %v858, 1e-05
    %v875 = vadd.f32 %v859, 1e-05
    %v876 = vadd.f32 %v860, 1e-05
    %v877 = vadd.f32 %v861, 1e-05
    %v878 = vadd.f32 %v862, 1e-05
    %v879 = vadd.f32 %v863, 1e-05
    %v880 = vadd.f32 %v864, 1e-05
    %v881 = vadd.f32 %v865, 1e-05
    %v882 = vadd.f32 %v866, 1e-05
    %v883 = vadd.f32 %v867, 1e-05
    %v884 = vadd.f32 %v868, 1e-05
    %v885 = vadd.f32 %v869, 1e-05
    %v886 = vrsqrt.pop %v870
    %v887 = vrsqrt.pop %v871
    %v888 = vrsqrt.pop %v872
    %v889 = vrsqrt.pop %v873
    %v890 = vrsqrt.pop %v874
    %v891 = vrsqrt.pop %v875
    %v892 = vrsqrt.pop %v876
    %v893 = vrsqrt.pop %v877
    %v894 = vrsqrt.pop %v878
    %v895 = vrsqrt.pop %v879
    %v896 = vrsqrt.pop %v880
    %v897 = vrsqrt.pop %v881
    %v898 = vrsqrt.pop %v882
    %v899 = vrsqrt.pop %v883
    %v900 = vrsqrt.pop %v884
    %v901 = vrsqrt.pop %v885
    %v902 = vld [vmem:[#allocation2] sm:$0x1]
    %v903 = vmul.f32 %v886, %v902
    %v904 = vmul.f32 %v887, %v902
    %v905 = vmul.f32 %v888, %v902
    %v906 = vmul.f32 %v889, %v902
    %v907 = vmul.f32 %v890, %v902
    %v908 = vmul.f32 %v891, %v902
    %v909 = vmul.f32 %v892, %v902
    %v910 = vmul.f32 %v893, %v902
    %v911 = vmul.f32 %v894, %v902
    %v912 = vmul.f32 %v895, %v902
    %v913 = vmul.f32 %v896, %v902
    %v914 = vmul.f32 %v897, %v902
    %v915 = vmul.f32 %v898, %v902
    %v916 = vmul.f32 %v899, %v902
    %v917 = vmul.f32 %v900, %v902
    %v918 = vmul.f32 %v901, %v902
    %v919 = vsub.f32 %v262, %v806
    %v920 = vsub.f32 %v263, %v806
    %v921 = vsub.f32 %v264, %v806
    %v922 = vsub.f32 %v265, %v806
    %v923 = vsub.f32 %v266, %v807
    %v924 = vsub.f32 %v267, %v807
    %v925 = vsub.f32 %v268, %v807
    %v926 = vsub.f32 %v269, %v807
    %v927 = vsub.f32 %v270, %v808
    %v928 = vsub.f32 %v271, %v808
    %v929 = vsub.f32 %v272, %v808
    %v930 = vsub.f32 %v273, %v808
    %v931 = vsub.f32 %v274, %v809
    %v932 = vsub.f32 %v275, %v809
    %v933 = vsub.f32 %v276, %v809
    %v934 = vsub.f32 %v277, %v809
    %v935 = vsub.f32 %v278, %v810
    %v936 = vsub.f32 %v279, %v810
    %v937 = vsub.f32 %v280, %v810
    %v938 = vsub.f32 %v281, %v810
    %v939 = vsub.f32 %v282, %v811
    %v940 = vsub.f32 %v283, %v811
    %v941 = vsub.f32 %v284, %v811
    %v942 = vsub.f32 %v285, %v811
    %v943 = vsub.f32 %v286, %v812
    %v944 = vsub.f32 %v287, %v812
    %v945 = vsub.f32 %v288, %v812
    %v946 = vsub.f32 %v289, %v812
    %v947 = vsub.f32 %v290, %v813
    %v948 = vsub.f32 %v291, %v813
    %v949 = vsub.f32 %v292, %v813
    %v950 = vsub.f32 %v293, %v813
    %v951 = vsub.f32 %v294, %v814
    %v952 = vsub.f32 %v295, %v814
    %v953 = vsub.f32 %v296, %v814
    %v954 = vsub.f32 %v297, %v814
    %v955 = vsub.f32 %v298, %v815
    %v956 = vsub.f32 %v299, %v815
    %v957 = vsub.f32 %v300, %v815
    %v958 = vsub.f32 %v301, %v815
    %v959 = vsub.f32 %v302, %v816
    %v960 = vsub.f32 %v303, %v816
    %v961 = vsub.f32 %v304, %v816
    %v962 = vsub.f32 %v305, %v816
    %v963 = vsub.f32 %v306, %v817
    %v964 = vsub.f32 %v307, %v817
    %v965 = vsub.f32 %v308, %v817
    %v966 = vsub.f32 %v309, %v817
    %v967 = vsub.f32 %v310, %v818
    %v968 = vsub.f32 %v311, %v818
    %v969 = vsub.f32 %v312, %v818
    %v970 = vsub.f32 %v313, %v818
    %v971 = vsub.f32 %v314, %v819
    %v972 = vsub.f32 %v315, %v819
    %v973 = vsub.f32 %v316, %v819
    %v974 = vsub.f32 %v317, %v819
    %v975 = vsub.f32 %v318, %v820
    %v976 = vsub.f32 %v319, %v820
    %v977 = vsub.f32 %v320, %v820
    %v978 = vsub.f32 %v321, %v820
    %v979 = vsub.f32 %v322, %v821
    %v980 = vsub.f32 %v323, %v821
    %v981 = vsub.f32 %v324, %v821
    %v982 = vsub.f32 %v325, %v821
    %v999 = vlaneseq
    %v1000 = vshrl.u32 %v999, 7
    %v1001 = vsub.s32 0, %v1000
    %v1002 = vrot.slane %v903, %v1001
    %v1003 = vlaneseq
    %v1004 = vshrl.u32 %v1003, 7
    %v1005 = vsub.s32 0, %v1004
    %v1006 = vrot.slane %v904, %v1005
    %v1007 = vlaneseq
    %v1008 = vshrl.u32 %v1007, 7
    %v1009 = vsub.s32 0, %v1008
    %v1010 = vrot.slane %v905, %v1009
    %v1011 = vlaneseq
    %v1012 = vshrl.u32 %v1011, 7
    %v1013 = vsub.s32 0, %v1012
    %v1014 = vrot.slane %v906, %v1013
    %v1015 = vlaneseq
    %v1016 = vshrl.u32 %v1015, 7
    %v1017 = vsub.s32 0, %v1016
    %v1018 = vrot.slane %v907, %v1017
    %v1019 = vlaneseq
    %v1020 = vshrl.u32 %v1019, 7
    %v1021 = vsub.s32 0, %v1020
    %v1022 = vrot.slane %v908, %v1021
    %v1023 = vlaneseq
    %v1024 = vshrl.u32 %v1023, 7
    %v1025 = vsub.s32 0, %v1024
    %v1026 = vrot.slane %v909, %v1025
    %v1027 = vlaneseq
    %v1028 = vshrl.u32 %v1027, 7
    %v1029 = vsub.s32 0, %v1028
    %v1030 = vrot.slane %v910, %v1029
    %v1031 = vlaneseq
    %v1032 = vshrl.u32 %v1031, 7
    %v1033 = vsub.s32 0, %v1032
    %v1034 = vrot.slane %v911, %v1033
    %v1035 = vlaneseq
    %v1036 = vshrl.u32 %v1035, 7
    %v1037 = vsub.s32 0, %v1036
    %v1038 = vrot.slane %v912, %v1037
    %v1039 = vlaneseq
    %v1040 = vshrl.u32 %v1039, 7
    %v1041 = vsub.s32 0, %v1040
    %v1042 = vrot.slane %v913, %v1041
    %v1043 = vlaneseq
    %v1044 = vshrl.u32 %v1043, 7
    %v1045 = vsub.s32 0, %v1044
    %v1046 = vrot.slane %v914, %v1045
    %v1047 = vlaneseq
    %v1048 = vshrl.u32 %v1047, 7
    %v1049 = vsub.s32 0, %v1048
    %v1050 = vrot.slane %v915, %v1049
    %v1051 = vlaneseq
    %v1052 = vshrl.u32 %v1051, 7
    %v1053 = vsub.s32 0, %v1052
    %v1054 = vrot.slane %v916, %v1053
    %v1055 = vlaneseq
    %v1056 = vshrl.u32 %v1055, 7
    %v1057 = vsub.s32 0, %v1056
    %v1058 = vrot.slane %v917, %v1057
    %v1059 = vlaneseq
    %v1060 = vshrl.u32 %v1059, 7
    %v1061 = vsub.s32 0, %v1060
    %v1062 = vrot.slane %v918, %v1061
    %1063 = vset.pattern.permute.xlu0 0
    %1064 = vperm.xlu0 %1063, %v1002
    %v1065 = vpop.permute.xlu0 %1064
    %1067 = vset.pattern.permute.xlu0 0
    %1068 = vperm.xlu0 %1067, %v1006
    %v1069 = vpop.permute.xlu0 %1068
    %1071 = vset.pattern.permute.xlu0 0
    %1072 = vperm.xlu0 %1071, %v1010
    %v1073 = vpop.permute.xlu0 %1072
    %1075 = vset.pattern.permute.xlu0 0
    %1076 = vperm.xlu0 %1075, %v1014
    %v1077 = vpop.permute.xlu0 %1076
    %1079 = vset.pattern.permute.xlu0 0
    %1080 = vperm.xlu0 %1079, %v1018
    %v1081 = vpop.permute.xlu0 %1080
    %1083 = vset.pattern.permute.xlu0 0
    %1084 = vperm.xlu0 %1083, %v1022
    %v1085 = vpop.permute.xlu0 %1084
    %1087 = vset.pattern.permute.xlu0 0
    %1088 = vperm.xlu0 %1087, %v1026
    %v1089 = vpop.permute.xlu0 %1088
    %1091 = vset.pattern.permute.xlu0 0
    %1092 = vperm.xlu0 %1091, %v1030
    %v1093 = vpop.permute.xlu0 %1092
    %1095 = vset.pattern.permute.xlu0 0
    %1096 = vperm.xlu0 %1095, %v1034
    %v1097 = vpop.permute.xlu0 %1096
    %1099 = vset.pattern.permute.xlu0 0
    %1100 = vperm.xlu0 %1099, %v1038
    %v1101 = vpop.permute.xlu0 %1100
    %1103 = vset.pattern.permute.xlu0 0
    %1104 = vperm.xlu0 %1103, %v1042
    %v1105 = vpop.permute.xlu0 %1104
    %1107 = vset.pattern.permute.xlu0 0
    %1108 = vperm.xlu0 %1107, %v1046
    %v1109 = vpop.permute.xlu0 %1108
    %1111 = vset.pattern.permute.xlu0 0
    %1112 = vperm.xlu0 %1111, %v1050
    %v1113 = vpop.permute.xlu0 %1112
    %1115 = vset.pattern.permute.xlu0 0
    %1116 = vperm.xlu0 %1115, %v1054
    %v1117 = vpop.permute.xlu0 %1116
    %1119 = vset.pattern.permute.xlu0 0
    %1120 = vperm.xlu0 %1119, %v1058
    %v1121 = vpop.permute.xlu0 %1120
    %1123 = vset.pattern.permute.xlu0 0
    %1124 = vperm.xlu0 %1123, %v1062
    %v1125 = vpop.permute.xlu0 %1124
    %v1127 = vmul.f32 %v919, %v1065
    %v1128 = vmul.f32 %v920, %v1065
    %v1129 = vmul.f32 %v921, %v1065
    %v1130 = vmul.f32 %v922, %v1065
    %v1131 = vmul.f32 %v923, %v1069
    %v1132 = vmul.f32 %v924, %v1069
    %v1133 = vmul.f32 %v925, %v1069
    %v1134 = vmul.f32 %v926, %v1069
    %v1135 = vmul.f32 %v927, %v1073
    %v1136 = vmul.f32 %v928, %v1073
    %v1137 = vmul.f32 %v929, %v1073
    %v1138 = vmul.f32 %v930, %v1073
    %v1139 = vmul.f32 %v931, %v1077
    %v1140 = vmul.f32 %v932, %v1077
    %v1141 = vmul.f32 %v933, %v1077
    %v1142 = vmul.f32 %v934, %v1077
    %v1143 = vmul.f32 %v935, %v1081
    %v1144 = vmul.f32 %v936, %v1081
    %v1145 = vmul.f32 %v937, %v1081
    %v1146 = vmul.f32 %v938, %v1081
    %v1147 = vmul.f32 %v939, %v1085
    %v1148 = vmul.f32 %v940, %v1085
    %v1149 = vmul.f32 %v941, %v1085
    %v1150 = vmul.f32 %v942, %v1085
    %v1151 = vmul.f32 %v943, %v1089
    %v1152 = vmul.f32 %v944, %v1089
    %v1153 = vmul.f32 %v945, %v1089
    %v1154 = vmul.f32 %v946, %v1089
    %v1155 = vmul.f32 %v947, %v1093
    %v1156 = vmul.f32 %v948, %v1093
    %v1157 = vmul.f32 %v949, %v1093
    %v1158 = vmul.f32 %v950, %v1093
    %v1159 = vmul.f32 %v951, %v1097
    %v1160 = vmul.f32 %v952, %v1097
    %v1161 = vmul.f32 %v953, %v1097
    %v1162 = vmul.f32 %v954, %v1097
    %v1163 = vmul.f32 %v955, %v1101
    %v1164 = vmul.f32 %v956, %v1101
    %v1165 = vmul.f32 %v957, %v1101
    %v1166 = vmul.f32 %v958, %v1101
    %v1167 = vmul.f32 %v959, %v1105
    %v1168 = vmul.f32 %v960, %v1105
    %v1169 = vmul.f32 %v961, %v1105
    %v1170 = vmul.f32 %v962, %v1105
    %v1171 = vmul.f32 %v963, %v1109
    %v1172 = vmul.f32 %v964, %v1109
    %v1173 = vmul.f32 %v965, %v1109
    %v1174 = vmul.f32 %v966, %v1109
    %v1175 = vmul.f32 %v967, %v1113
    %v1176 = vmul.f32 %v968, %v1113
    %v1177 = vmul.f32 %v969, %v1113
    %v1178 = vmul.f32 %v970, %v1113
    %v1179 = vmul.f32 %v971, %v1117
    %v1180 = vmul.f32 %v972, %v1117
    %v1181 = vmul.f32 %v973, %v1117
    %v1182 = vmul.f32 %v974, %v1117
    %v1183 = vmul.f32 %v975, %v1121
    %v1184 = vmul.f32 %v976, %v1121
    %v1185 = vmul.f32 %v977, %v1121
    %v1186 = vmul.f32 %v978, %v1121
    %v1187 = vmul.f32 %v979, %v1125
    %v1188 = vmul.f32 %v980, %v1125
    %v1189 = vmul.f32 %v981, %v1125
    %v1190 = vmul.f32 %v982, %v1125
    %v1191 = vld [vmem:[#allocation3] sm:$0x1]
    %v1193 = vlaneseq
    %v1194 = vshrl.u32 %v1193, 7
    %v1195 = vsub.s32 0, %v1194
    %v1196 = vrot.slane %v1191, %v1195
    %1197 = vset.pattern.permute.xlu0 0
    %1198 = vperm.xlu0 %1197, %v1196
    %v1199 = vpop.permute.xlu0 %1198
    %v1201 = vadd.f32 %v1127, %v1199
    %v1202 = vadd.f32 %v1128, %v1199
    %v1203 = vadd.f32 %v1129, %v1199
    %v1204 = vadd.f32 %v1130, %v1199
    %v1205 = vadd.f32 %v1131, %v1199
    %v1206 = vadd.f32 %v1132, %v1199
    %v1207 = vadd.f32 %v1133, %v1199
    %v1208 = vadd.f32 %v1134, %v1199
    %v1209 = vadd.f32 %v1135, %v1199
    %v1210 = vadd.f32 %v1136, %v1199
    %v1211 = vadd.f32 %v1137, %v1199
    %v1212 = vadd.f32 %v1138, %v1199
    %v1213 = vadd.f32 %v1139, %v1199
    %v1214 = vadd.f32 %v1140, %v1199
    %v1215 = vadd.f32 %v1141, %v1199
    %v1216 = vadd.f32 %v1142, %v1199
    %v1217 = vadd.f32 %v1143, %v1199
    %v1218 = vadd.f32 %v1144, %v1199
    %v1219 = vadd.f32 %v1145, %v1199
    %v1220 = vadd.f32 %v1146, %v1199
    %v1221 = vadd.f32 %v1147, %v1199
    %v1222 = vadd.f32 %v1148, %v1199
    %v1223 = vadd.f32 %v1149, %v1199
    %v1224 = vadd.f32 %v1150, %v1199
    %v1225 = vadd.f32 %v1151, %v1199
    %v1226 = vadd.f32 %v1152, %v1199
    %v1227 = vadd.f32 %v1153, %v1199
    %v1228 = vadd.f32 %v1154, %v1199
    %v1229 = vadd.f32 %v1155, %v1199
    %v1230 = vadd.f32 %v1156, %v1199
    %v1231 = vadd.f32 %v1157, %v1199
    %v1232 = vadd.f32 %v1158, %v1199
    %v1233 = vadd.f32 %v1159, %v1199
    %v1234 = vadd.f32 %v1160, %v1199
    %v1235 = vadd.f32 %v1161, %v1199
    %v1236 = vadd.f32 %v1162, %v1199
    %v1237 = vadd.f32 %v1163, %v1199
    %v1238 = vadd.f32 %v1164, %v1199
    %v1239 = vadd.f32 %v1165, %v1199
    %v1240 = vadd.f32 %v1166, %v1199
    %v1241 = vadd.f32 %v1167, %v1199
    %v1242 = vadd.f32 %v1168, %v1199
    %v1243 = vadd.f32 %v1169, %v1199
    %v1244 = vadd.f32 %v1170, %v1199
    %v1245 = vadd.f32 %v1171, %v1199
    %v1246 = vadd.f32 %v1172, %v1199
    %v1247 = vadd.f32 %v1173, %v1199
    %v1248 = vadd.f32 %v1174, %v1199
    %v1249 = vadd.f32 %v1175, %v1199
    %v1250 = vadd.f32 %v1176, %v1199
    %v1251 = vadd.f32 %v1177, %v1199
    %v1252 = vadd.f32 %v1178, %v1199
    %v1253 = vadd.f32 %v1179, %v1199
    %v1254 = vadd.f32 %v1180, %v1199
    %v1255 = vadd.f32 %v1181, %v1199
    %v1256 = vadd.f32 %v1182, %v1199
    %v1257 = vadd.f32 %v1183, %v1199
    %v1258 = vadd.f32 %v1184, %v1199
    %v1259 = vadd.f32 %v1185, %v1199
    %v1260 = vadd.f32 %v1186, %v1199
    %v1261 = vadd.f32 %v1187, %v1199
    %v1262 = vadd.f32 %v1188, %v1199
    %v1263 = vadd.f32 %v1189, %v1199
    %v1264 = vadd.f32 %v1190, %v1199
    %v1265 = vlaneseq
    %v1266 = vshrl.u32 %v1265, 7
    %v1267 = vsub.s32 0, %v1266
    %v1268 = vrot.slane %v259, %v1267
    %1270 = vbcast.lane.b32.xlu0 %v1268, 256
    %v1271 = vpop.permute.xlu0 %1270
    %s1273 = sor.u32 256, 8
    %1274 = vbcast.lane.b32.xlu0 %v1268, %s1273
    %v1275 = vpop.permute.xlu0 %1274
    %v1276 = vlaneseq
    %v1277 = vshrl.u32 %v1276, 7
    %v1278 = vsub.s32 1, %v1277
    %v1279 = vrot.slane %v259, %v1278
    %1281 = vbcast.lane.b32.xlu0 %v1279, 256
    %v1282 = vpop.permute.xlu0 %1281
    %s1284 = sor.u32 256, 8
    %1285 = vbcast.lane.b32.xlu0 %v1279, %s1284
    %v1286 = vpop.permute.xlu0 %1285
    %v1287 = vlaneseq
    %v1288 = vshrl.u32 %v1287, 7
    %v1289 = vsub.s32 2, %v1288
    %v1290 = vrot.slane %v259, %v1289
    %1292 = vbcast.lane.b32.xlu0 %v1290, 256
    %v1293 = vpop.permute.xlu0 %1292
    %s1295 = sor.u32 256, 8
    %1296 = vbcast.lane.b32.xlu0 %v1290, %s1295
    %v1297 = vpop.permute.xlu0 %1296
    %v1298 = vlaneseq
    %v1299 = vshrl.u32 %v1298, 7
    %v1300 = vsub.s32 3, %v1299
    %v1301 = vrot.slane %v259, %v1300
    %1303 = vbcast.lane.b32.xlu0 %v1301, 256
    %v1304 = vpop.permute.xlu0 %1303
    %s1306 = sor.u32 256, 8
    %1307 = vbcast.lane.b32.xlu0 %v1301, %s1306
    %v1308 = vpop.permute.xlu0 %1307
    %v1309 = vlaneseq
    %v1310 = vshrl.u32 %v1309, 7
    %v1311 = vsub.s32 4, %v1310
    %v1312 = vrot.slane %v259, %v1311
    %1314 = vbcast.lane.b32.xlu0 %v1312, 256
    %v1315 = vpop.permute.xlu0 %1314
    %s1317 = sor.u32 256, 8
    %1318 = vbcast.lane.b32.xlu0 %v1312, %s1317
    %v1319 = vpop.permute.xlu0 %1318
    %v1320 = vlaneseq
    %v1321 = vshrl.u32 %v1320, 7
    %v1322 = vsub.s32 5, %v1321
    %v1323 = vrot.slane %v259, %v1322
    %1325 = vbcast.lane.b32.xlu0 %v1323, 256
    %v1326 = vpop.permute.xlu0 %1325
    %s1328 = sor.u32 256, 8
    %1329 = vbcast.lane.b32.xlu0 %v1323, %s1328
    %v1330 = vpop.permute.xlu0 %1329
    %v1331 = vlaneseq
    %v1332 = vshrl.u32 %v1331, 7
    %v1333 = vsub.s32 6, %v1332
    %v1334 = vrot.slane %v259, %v1333
    %1336 = vbcast.lane.b32.xlu0 %v1334, 256
    %v1337 = vpop.permute.xlu0 %1336
    %s1339 = sor.u32 256, 8
    %1340 = vbcast.lane.b32.xlu0 %v1334, %s1339
    %v1341 = vpop.permute.xlu0 %1340
    %v1342 = vlaneseq
    %v1343 = vshrl.u32 %v1342, 7
    %v1344 = vsub.s32 7, %v1343
    %v1345 = vrot.slane %v259, %v1344
    %1347 = vbcast.lane.b32.xlu0 %v1345, 256
    %v1348 = vpop.permute.xlu0 %1347
    %s1350 = sor.u32 256, 8
    %1351 = vbcast.lane.b32.xlu0 %v1345, %s1350
    %v1352 = vpop.permute.xlu0 %1351
    %v1353 = vlaneseq
    %v1354 = vshrl.u32 %v1353, 7
    %v1355 = vsub.s32 0, %v1354
    %v1356 = vrot.slane %v261, %v1355
    %1358 = vbcast.lane.b32.xlu0 %v1356, 256
    %v1359 = vpop.permute.xlu0 %1358
    %s1361 = sor.u32 256, 8
    %1362 = vbcast.lane.b32.xlu0 %v1356, %s1361
    %v1363 = vpop.permute.xlu0 %1362
    %v1364 = vlaneseq
    %v1365 = vshrl.u32 %v1364, 7
    %v1366 = vsub.s32 1, %v1365
    %v1367 = vrot.slane %v261, %v1366
    %1369 = vbcast.lane.b32.xlu0 %v1367, 256
    %v1370 = vpop.permute.xlu0 %1369
    %s1372 = sor.u32 256, 8
    %1373 = vbcast.lane.b32.xlu0 %v1367, %s1372
    %v1374 = vpop.permute.xlu0 %1373
    %v1375 = vlaneseq
    %v1376 = vshrl.u32 %v1375, 7
    %v1377 = vsub.s32 2, %v1376
    %v1378 = vrot.slane %v261, %v1377
    %1380 = vbcast.lane.b32.xlu0 %v1378, 256
    %v1381 = vpop.permute.xlu0 %1380
    %s1383 = sor.u32 256, 8
    %1384 = vbcast.lane.b32.xlu0 %v1378, %s1383
    %v1385 = vpop.permute.xlu0 %1384
    %v1386 = vlaneseq
    %v1387 = vshrl.u32 %v1386, 7
    %v1388 = vsub.s32 3, %v1387
    %v1389 = vrot.slane %v261, %v1388
    %1391 = vbcast.lane.b32.xlu0 %v1389, 256
    %v1392 = vpop.permute.xlu0 %1391
    %s1394 = sor.u32 256, 8
    %1395 = vbcast.lane.b32.xlu0 %v1389, %s1394
    %v1396 = vpop.permute.xlu0 %1395
    %v1397 = vlaneseq
    %v1398 = vshrl.u32 %v1397, 7
    %v1399 = vsub.s32 4, %v1398
    %v1400 = vrot.slane %v261, %v1399
    %1402 = vbcast.lane.b32.xlu0 %v1400, 256
    %v1403 = vpop.permute.xlu0 %1402
    %s1405 = sor.u32 256, 8
    %1406 = vbcast.lane.b32.xlu0 %v1400, %s1405
    %v1407 = vpop.permute.xlu0 %1406
    %v1408 = vlaneseq
    %v1409 = vshrl.u32 %v1408, 7
    %v1410 = vsub.s32 5, %v1409
    %v1411 = vrot.slane %v261, %v1410
    %1413 = vbcast.lane.b32.xlu0 %v1411, 256
    %v1414 = vpop.permute.xlu0 %1413
    %s1416 = sor.u32 256, 8
    %1417 = vbcast.lane.b32.xlu0 %v1411, %s1416
    %v1418 = vpop.permute.xlu0 %1417
    %v1419 = vlaneseq
    %v1420 = vshrl.u32 %v1419, 7
    %v1421 = vsub.s32 6, %v1420
    %v1422 = vrot.slane %v261, %v1421
    %1424 = vbcast.lane.b32.xlu0 %v1422, 256
    %v1425 = vpop.permute.xlu0 %1424
    %s1427 = sor.u32 256, 8
    %1428 = vbcast.lane.b32.xlu0 %v1422, %s1427
    %v1429 = vpop.permute.xlu0 %1428
    %v1430 = vlaneseq
    %v1431 = vshrl.u32 %v1430, 7
    %v1432 = vsub.s32 7, %v1431
    %v1433 = vrot.slane %v261, %v1432
    %1435 = vbcast.lane.b32.xlu0 %v1433, 256
    %v1436 = vpop.permute.xlu0 %1435
    %s1438 = sor.u32 256, 8
    %1439 = vbcast.lane.b32.xlu0 %v1433, %s1438
    %v1440 = vpop.permute.xlu0 %1439
    %v1441 = vmul.f32 %v1271, %v1201
    %v1442 = vmul.f32 %v1271, %v1202
    %v1443 = vmul.f32 %v1275, %v1203
    %v1444 = vmul.f32 %v1275, %v1204
    %v1445 = vmul.f32 %v1282, %v1205
    %v1446 = vmul.f32 %v1282, %v1206
    %v1447 = vmul.f32 %v1286, %v1207
    %v1448 = vmul.f32 %v1286, %v1208
    %v1449 = vmul.f32 %v1293, %v1209
    %v1450 = vmul.f32 %v1293, %v1210
    %v1451 = vmul.f32 %v1297, %v1211
    %v1452 = vmul.f32 %v1297, %v1212
    %v1453 = vmul.f32 %v1304, %v1213
    %v1454 = vmul.f32 %v1304, %v1214
    %v1455 = vmul.f32 %v1308, %v1215
    %v1456 = vmul.f32 %v1308, %v1216
    %v1457 = vmul.f32 %v1315, %v1217
    %v1458 = vmul.f32 %v1315, %v1218
    %v1459 = vmul.f32 %v1319, %v1219
    %v1460 = vmul.f32 %v1319, %v1220
    %v1461 = vmul.f32 %v1326, %v1221
    %v1462 = vmul.f32 %v1326, %v1222
    %v1463 = vmul.f32 %v1330, %v1223
    %v1464 = vmul.f32 %v1330, %v1224
    %v1465 = vmul.f32 %v1337, %v1225
    %v1466 = vmul.f32 %v1337, %v1226
    %v1467 = vmul.f32 %v1341, %v1227
    %v1468 = vmul.f32 %v1341, %v1228
    %v1469 = vmul.f32 %v1348, %v1229
    %v1470 = vmul.f32 %v1348, %v1230
    %v1471 = vmul.f32 %v1352, %v1231
    %v1472 = vmul.f32 %v1352, %v1232
    %v1473 = vmul.f32 %v1359, %v1233
    %v1474 = vmul.f32 %v1359, %v1234
    %v1475 = vmul.f32 %v1363, %v1235
    %v1476 = vmul.f32 %v1363, %v1236
    %v1477 = vmul.f32 %v1370, %v1237
    %v1478 = vmul.f32 %v1370, %v1238
    %v1479 = vmul.f32 %v1374, %v1239
    %v1480 = vmul.f32 %v1374, %v1240
    %v1481 = vmul.f32 %v1381, %v1241
    %v1482 = vmul.f32 %v1381, %v1242
    %v1483 = vmul.f32 %v1385, %v1243
    %v1484 = vmul.f32 %v1385, %v1244
    %v1485 = vmul.f32 %v1392, %v1245
    %v1486 = vmul.f32 %v1392, %v1246
    %v1487 = vmul.f32 %v1396, %v1247
    %v1488 = vmul.f32 %v1396, %v1248
    %v1489 = vmul.f32 %v1403, %v1249
    %v1490 = vmul.f32 %v1403, %v1250
    %v1491 = vmul.f32 %v1407, %v1251
    %v1492 = vmul.f32 %v1407, %v1252
    %v1493 = vmul.f32 %v1414, %v1253
    %v1494 = vmul.f32 %v1414, %v1254
    %v1495 = vmul.f32 %v1418, %v1255
    %v1496 = vmul.f32 %v1418, %v1256
    %v1497 = vmul.f32 %v1425, %v1257
    %v1498 = vmul.f32 %v1425, %v1258
    %v1499 = vmul.f32 %v1429, %v1259
    %v1500 = vmul.f32 %v1429, %v1260
    %v1501 = vmul.f32 %v1436, %v1261
    %v1502 = vmul.f32 %v1436, %v1262
    %v1503 = vmul.f32 %v1440, %v1263
    %v1504 = vmul.f32 %v1440, %v1264
    %v1505 = vadd.f32 %v1441, %v1443
    %v1506 = vrot.slane %v1505, 4
    %v1507 = vadd.f32 %v1505, %v1506
    %v1508 = vrot.slane %v1507, 2
    %v1509 = vadd.f32 %v1507, %v1508
    %v1510 = vrot.slane %v1509, 1
    %v1511 = vadd.f32 %v1509, %v1510
    %v1512 = vadd.f32 %v1442, %v1444
    %v1513 = vrot.slane %v1512, 4
    %v1514 = vadd.f32 %v1512, %v1513
    %v1515 = vrot.slane %v1514, 2
    %v1516 = vadd.f32 %v1514, %v1515
    %v1517 = vrot.slane %v1516, 1
    %v1518 = vadd.f32 %v1516, %v1517
    %v1519 = vadd.f32 %v1445, %v1447
    %v1520 = vrot.slane %v1519, 4
    %v1521 = vadd.f32 %v1519, %v1520
    %v1522 = vrot.slane %v1521, 2
    %v1523 = vadd.f32 %v1521, %v1522
    %v1524 = vrot.slane %v1523, 1
    %v1525 = vadd.f32 %v1523, %v1524
    %v1526 = vadd.f32 %v1446, %v1448
    %v1527 = vrot.slane %v1526, 4
    %v1528 = vadd.f32 %v1526, %v1527
    %v1529 = vrot.slane %v1528, 2
    %v1530 = vadd.f32 %v1528, %v1529
    %v1531 = vrot.slane %v1530, 1
    %v1532 = vadd.f32 %v1530, %v1531
    %v1533 = vadd.f32 %v1449, %v1451
    %v1534 = vrot.slane %v1533, 4
    %v1535 = vadd.f32 %v1533, %v1534
    %v1536 = vrot.slane %v1535, 2
    %v1537 = vadd.f32 %v1535, %v1536
    %v1538 = vrot.slane %v1537, 1
    %v1539 = vadd.f32 %v1537, %v1538
    %v1540 = vadd.f32 %v1450, %v1452
    %v1541 = vrot.slane %v1540, 4
    %v1542 = vadd.f32 %v1540, %v1541
    %v1543 = vrot.slane %v1542, 2
    %v1544 = vadd.f32 %v1542, %v1543
    %v1545 = vrot.slane %v1544, 1
    %v1546 = vadd.f32 %v1544, %v1545
    %v1547 = vadd.f32 %v1453, %v1455
    %v1548 = vrot.slane %v1547, 4
    %v1549 = vadd.f32 %v1547, %v1548
    %v1550 = vrot.slane %v1549, 2
    %v1551 = vadd.f32 %v1549, %v1550
    %v1552 = vrot.slane %v1551, 1
    %v1553 = vadd.f32 %v1551, %v1552
    %v1554 = vadd.f32 %v1454, %v1456
    %v1555 = vrot.slane %v1554, 4
    %v1556 = vadd.f32 %v1554, %v1555
    %v1557 = vrot.slane %v1556, 2
    %v1558 = vadd.f32 %v1556, %v1557
    %v1559 = vrot.slane %v1558, 1
    %v1560 = vadd.f32 %v1558, %v1559
    %v1561 = vadd.f32 %v1457, %v1459
    %v1562 = vrot.slane %v1561, 4
    %v1563 = vadd.f32 %v1561, %v1562
    %v1564 = vrot.slane %v1563, 2
    %v1565 = vadd.f32 %v1563, %v1564
    %v1566 = vrot.slane %v1565, 1
    %v1567 = vadd.f32 %v1565, %v1566
    %v1568 = vadd.f32 %v1458, %v1460
    %v1569 = vrot.slane %v1568, 4
    %v1570 = vadd.f32 %v1568, %v1569
    %v1571 = vrot.slane %v1570, 2
    %v1572 = vadd.f32 %v1570, %v1571
    %v1573 = vrot.slane %v1572, 1
    %v1574 = vadd.f32 %v1572, %v1573
    %v1575 = vadd.f32 %v1461, %v1463
    %v1576 = vrot.slane %v1575, 4
    %v1577 = vadd.f32 %v1575, %v1576
    %v1578 = vrot.slane %v1577, 2
    %v1579 = vadd.f32 %v1577, %v1578
    %v1580 = vrot.slane %v1579, 1
    %v1581 = vadd.f32 %v1579, %v1580
    %v1582 = vadd.f32 %v1462, %v1464
    %v1583 = vrot.slane %v1582, 4
    %v1584 = vadd.f32 %v1582, %v1583
    %v1585 = vrot.slane %v1584, 2
    %v1586 = vadd.f32 %v1584, %v1585
    %v1587 = vrot.slane %v1586, 1
    %v1588 = vadd.f32 %v1586, %v1587
    %v1589 = vadd.f32 %v1465, %v1467
    %v1590 = vrot.slane %v1589, 4
    %v1591 = vadd.f32 %v1589, %v1590
    %v1592 = vrot.slane %v1591, 2
    %v1593 = vadd.f32 %v1591, %v1592
    %v1594 = vrot.slane %v1593, 1
    %v1595 = vadd.f32 %v1593, %v1594
    %v1596 = vadd.f32 %v1466, %v1468
    %v1597 = vrot.slane %v1596, 4
    %v1598 = vadd.f32 %v1596, %v1597
    %v1599 = vrot.slane %v1598, 2
    %v1600 = vadd.f32 %v1598, %v1599
    %v1601 = vrot.slane %v1600, 1
    %v1602 = vadd.f32 %v1600, %v1601
    %v1603 = vadd.f32 %v1469, %v1471
    %v1604 = vrot.slane %v1603, 4
    %v1605 = vadd.f32 %v1603, %v1604
    %v1606 = vrot.slane %v1605, 2
    %v1607 = vadd.f32 %v1605, %v1606
    %v1608 = vrot.slane %v1607, 1
    %v1609 = vadd.f32 %v1607, %v1608
    %v1610 = vadd.f32 %v1470, %v1472
    %v1611 = vrot.slane %v1610, 4
    %v1612 = vadd.f32 %v1610, %v1611
    %v1613 = vrot.slane %v1612, 2
    %v1614 = vadd.f32 %v1612, %v1613
    %v1615 = vrot.slane %v1614, 1
    %v1616 = vadd.f32 %v1614, %v1615
    %v1617 = vadd.f32 %v1473, %v1475
    %v1618 = vrot.slane %v1617, 4
    %v1619 = vadd.f32 %v1617, %v1618
    %v1620 = vrot.slane %v1619, 2
    %v1621 = vadd.f32 %v1619, %v1620
    %v1622 = vrot.slane %v1621, 1
    %v1623 = vadd.f32 %v1621, %v1622
    %v1624 = vadd.f32 %v1474, %v1476
    %v1625 = vrot.slane %v1624, 4
    %v1626 = vadd.f32 %v1624, %v1625
    %v1627 = vrot.slane %v1626, 2
    %v1628 = vadd.f32 %v1626, %v1627
    %v1629 = vrot.slane %v1628, 1
    %v1630 = vadd.f32 %v1628, %v1629
    %v1631 = vadd.f32 %v1477, %v1479
    %v1632 = vrot.slane %v1631, 4
    %v1633 = vadd.f32 %v1631, %v1632
    %v1634 = vrot.slane %v1633, 2
    %v1635 = vadd.f32 %v1633, %v1634
    %v1636 = vrot.slane %v1635, 1
    %v1637 = vadd.f32 %v1635, %v1636
    %v1638 = vadd.f32 %v1478, %v1480
    %v1639 = vrot.slane %v1638, 4
    %v1640 = vadd.f32 %v1638, %v1639
    %v1641 = vrot.slane %v1640, 2
    %v1642 = vadd.f32 %v1640, %v1641
    %v1643 = vrot.slane %v1642, 1
    %v1644 = vadd.f32 %v1642, %v1643
    %v1645 = vadd.f32 %v1481, %v1483
    %v1646 = vrot.slane %v1645, 4
    %v1647 = vadd.f32 %v1645, %v1646
    %v1648 = vrot.slane %v1647, 2
    %v1649 = vadd.f32 %v1647, %v1648
    %v1650 = vrot.slane %v1649, 1
    %v1651 = vadd.f32 %v1649, %v1650
    %v1652 = vadd.f32 %v1482, %v1484
    %v1653 = vrot.slane %v1652, 4
    %v1654 = vadd.f32 %v1652, %v1653
    %v1655 = vrot.slane %v1654, 2
    %v1656 = vadd.f32 %v1654, %v1655
    %v1657 = vrot.slane %v1656, 1
    %v1658 = vadd.f32 %v1656, %v1657
    %v1659 = vadd.f32 %v1485, %v1487
    %v1660 = vrot.slane %v1659, 4
    %v1661 = vadd.f32 %v1659, %v1660
    %v1662 = vrot.slane %v1661, 2
    %v1663 = vadd.f32 %v1661, %v1662
    %v1664 = vrot.slane %v1663, 1
    %v1665 = vadd.f32 %v1663, %v1664
    %v1666 = vadd.f32 %v1486, %v1488
    %v1667 = vrot.slane %v1666, 4
    %v1668 = vadd.f32 %v1666, %v1667
    %v1669 = vrot.slane %v1668, 2
    %v1670 = vadd.f32 %v1668, %v1669
    %v1671 = vrot.slane %v1670, 1
    %v1672 = vadd.f32 %v1670, %v1671
    %v1673 = vadd.f32 %v1489, %v1491
    %v1674 = vrot.slane %v1673, 4
    %v1675 = vadd.f32 %v1673, %v1674
    %v1676 = vrot.slane %v1675, 2
    %v1677 = vadd.f32 %v1675, %v1676
    %v1678 = vrot.slane %v1677, 1
    %v1679 = vadd.f32 %v1677, %v1678
    %v1680 = vadd.f32 %v1490, %v1492
    %v1681 = vrot.slane %v1680, 4
    %v1682 = vadd.f32 %v1680, %v1681
    %v1683 = vrot.slane %v1682, 2
    %v1684 = vadd.f32 %v1682, %v1683
    %v1685 = vrot.slane %v1684, 1
    %v1686 = vadd.f32 %v1684, %v1685
    %v1687 = vadd.f32 %v1493, %v1495
    %v1688 = vrot.slane %v1687, 4
    %v1689 = vadd.f32 %v1687, %v1688
    %v1690 = vrot.slane %v1689, 2
    %v1691 = vadd.f32 %v1689, %v1690
    %v1692 = vrot.slane %v1691, 1
    %v1693 = vadd.f32 %v1691, %v1692
    %v1694 = vadd.f32 %v1494, %v1496
    %v1695 = vrot.slane %v1694, 4
    %v1696 = vadd.f32 %v1694, %v1695
    %v1697 = vrot.slane %v1696, 2
    %v1698 = vadd.f32 %v1696, %v1697
    %v1699 = vrot.slane %v1698, 1
    %v1700 = vadd.f32 %v1698, %v1699
    %v1701 = vadd.f32 %v1497, %v1499
    %v1702 = vrot.slane %v1701, 4
    %v1703 = vadd.f32 %v1701, %v1702
    %v1704 = vrot.slane %v1703, 2
    %v1705 = vadd.f32 %v1703, %v1704
    %v1706 = vrot.slane %v1705, 1
    %v1707 = vadd.f32 %v1705, %v1706
    %v1708 = vadd.f32 %v1498, %v1500
    %v1709 = vrot.slane %v1708, 4
    %v1710 = vadd.f32 %v1708, %v1709
    %v1711 = vrot.slane %v1710, 2
    %v1712 = vadd.f32 %v1710, %v1711
    %v1713 = vrot.slane %v1712, 1
    %v1714 = vadd.f32 %v1712, %v1713
    %v1715 = vadd.f32 %v1501, %v1503
    %v1716 = vrot.slane %v1715, 4
    %v1717 = vadd.f32 %v1715, %v1716
    %v1718 = vrot.slane %v1717, 2
    %v1719 = vadd.f32 %v1717, %v1718
    %v1720 = vrot.slane %v1719, 1
    %v1721 = vadd.f32 %v1719, %v1720
    %v1722 = vadd.f32 %v1502, %v1504
    %v1723 = vrot.slane %v1722, 4
    %v1724 = vadd.f32 %v1722, %v1723
    %v1725 = vrot.slane %v1724, 2
    %v1726 = vadd.f32 %v1724, %v1725
    %v1727 = vrot.slane %v1726, 1
    %v1728 = vadd.f32 %v1726, %v1727
    %v1729 = vld [vmem:[%s8] sm:$0xf]
    %v1730 = vld [vmem:[%s9] sm:$0x1]
    %v1732 = vlaneseq
    %v1733 = vshrl.u32 %v1732, 7
    %v1734 = vsub.s32 0, %v1733
    %v1735 = vrot.slane %v1729, %v1734
    %v1736 = vlaneseq
    %v1737 = vshrl.u32 %v1736, 7
    %v1738 = vsub.s32 2, %v1737
    %v1739 = vrot.slane %v1729, %v1738
    %v1742 = vlaneseq
    %v1743 = vshrl.u32 %v1742, 7
    %v1744 = vsub.s32 0, %v1743
    %v1745 = vrot.slane %v1735, %v1744
    %v1746 = vlaneseq
    %v1747 = vshrl.u32 %v1746, 7
    %v1748 = vsub.s32 0, %v1747
    %v1749 = vrot.slane %v1739, %v1748
    %v1750 = vmul.f32 %v1511, %v1745
    %v1751 = vmul.f32 %v1518, %v1749
    %v1752 = vmul.f32 %v1525, %v1745
    %v1753 = vmul.f32 %v1532, %v1749
    %v1754 = vmul.f32 %v1539, %v1745
    %v1755 = vmul.f32 %v1546, %v1749
    %v1756 = vmul.f32 %v1553, %v1745
    %v1757 = vmul.f32 %v1560, %v1749
    %v1758 = vmul.f32 %v1567, %v1745
    %v1759 = vmul.f32 %v1574, %v1749
    %v1760 = vmul.f32 %v1581, %v1745
    %v1761 = vmul.f32 %v1588, %v1749
    %v1762 = vmul.f32 %v1595, %v1745
    %v1763 = vmul.f32 %v1602, %v1749
    %v1764 = vmul.f32 %v1609, %v1745
    %v1765 = vmul.f32 %v1616, %v1749
    %v1766 = vmul.f32 %v1623, %v1745
    %v1767 = vmul.f32 %v1630, %v1749
    %v1768 = vmul.f32 %v1637, %v1745
    %v1769 = vmul.f32 %v1644, %v1749
    %v1770 = vmul.f32 %v1651, %v1745
    %v1771 = vmul.f32 %v1658, %v1749
    %v1772 = vmul.f32 %v1665, %v1745
    %v1773 = vmul.f32 %v1672, %v1749
    %v1774 = vmul.f32 %v1679, %v1745
    %v1775 = vmul.f32 %v1686, %v1749
    %v1776 = vmul.f32 %v1693, %v1745
    %v1777 = vmul.f32 %v1700, %v1749
    %v1778 = vmul.f32 %v1707, %v1745
    %v1779 = vmul.f32 %v1714, %v1749
    %v1780 = vmul.f32 %v1721, %v1745
    %v1781 = vmul.f32 %v1728, %v1749
    %v1814 = vrot.slane %v1752, 7
    %vm1815 = vcmask 1041409
    %v1816 = vsel %vm1815, %v1814, %v1750
    %v1817 = vrot.slane %v1754, 6
    %vm1818 = vcmask 1042434
    %v1819 = vsel %vm1818, %v1817, %v1816
    %v1820 = vrot.slane %v1756, 5
    %vm1821 = vcmask 1043459
    %v1822 = vsel %vm1821, %v1820, %v1819
    %v1823 = vrot.slane %v1758, 4
    %vm1824 = vcmask 1044484
    %v1825 = vsel %vm1824, %v1823, %v1822
    %v1826 = vrot.slane %v1760, 3
    %vm1827 = vcmask 1045509
    %v1828 = vsel %vm1827, %v1826, %v1825
    %v1829 = vrot.slane %v1762, 2
    %vm1830 = vcmask 1046534
    %v1831 = vsel %vm1830, %v1829, %v1828
    %v1832 = vrot.slane %v1764, 1
    %vm1833 = vcmask 1047559
    %v1834 = vsel %vm1833, %v1832, %v1831
    %v1835 = vrot.slane %v1753, 7
    %v1836 = vsel %vm1815, %v1835, %v1751
    %v1837 = vrot.slane %v1755, 6
    %v1838 = vsel %vm1818, %v1837, %v1836
    %v1839 = vrot.slane %v1757, 5
    %v1840 = vsel %vm1821, %v1839, %v1838
    %v1841 = vrot.slane %v1759, 4
    %v1842 = vsel %vm1824, %v1841, %v1840
    %v1843 = vrot.slane %v1761, 3
    %v1844 = vsel %vm1827, %v1843, %v1842
    %v1845 = vrot.slane %v1763, 2
    %v1846 = vsel %vm1830, %v1845, %v1844
    %v1847 = vrot.slane %v1765, 1
    %v1848 = vsel %vm1833, %v1847, %v1846
    %v1849 = vrot.slane %v1768, 7
    %v1850 = vsel %vm1815, %v1849, %v1766
    %v1851 = vrot.slane %v1770, 6
    %v1852 = vsel %vm1818, %v1851, %v1850
    %v1853 = vrot.slane %v1772, 5
    %v1854 = vsel %vm1821, %v1853, %v1852
    %v1855 = vrot.slane %v1774, 4
    %v1856 = vsel %vm1824, %v1855, %v1854
    %v1857 = vrot.slane %v1776, 3
    %v1858 = vsel %vm1827, %v1857, %v1856
    %v1859 = vrot.slane %v1778, 2
    %v1860 = vsel %vm1830, %v1859, %v1858
    %v1861 = vrot.slane %v1780, 1
    %v1862 = vsel %vm1833, %v1861, %v1860
    %v1863 = vrot.slane %v1769, 7
    %v1864 = vsel %vm1815, %v1863, %v1767
    %v1865 = vrot.slane %v1771, 6
    %v1866 = vsel %vm1818, %v1865, %v1864
    %v1867 = vrot.slane %v1773, 5
    %v1868 = vsel %vm1821, %v1867, %v1866
    %v1869 = vrot.slane %v1775, 4
    %v1870 = vsel %vm1824, %v1869, %v1868
    %v1871 = vrot.slane %v1777, 3
    %v1872 = vsel %vm1827, %v1871, %v1870
    %v1873 = vrot.slane %v1779, 2
    %v1874 = vsel %vm1830, %v1873, %v1872
    %v1875 = vrot.slane %v1781, 1
    %v1876 = vsel %vm1833, %v1875, %v1874
    %v1881 = vadd.f32 %v1834, %v1848
    %1882 = vadd.xlane.f32.xlu0 %v1881
    %v1883 = vpop.xlane.xlu0 %1882
    %v1884 = vadd.f32 %v1862, %v1876
    %1885 = vadd.xlane.f32.xlu0 %v1884
    %v1886 = vpop.xlane.xlu0 %1885
    %v1888 = vlaneseq
    %v1889 = vshrl.u32 %v1888, 7
    %v1890 = vsub.s32 0, %v1889
    %v1891 = vrot.slane %v1730, %v1890
    %v1893 = vadd.f32 %v1883, %v1891
    %v1894 = vadd.f32 %v1886, %v1891
    %v1895 = vlaneseq
    %v1896 = vshrl.u32 %v1895, 7
    %v1897 = vsub.s32 1, %v1896
    %v1898 = vrot.slane %v1729, %v1897
    %v1899 = vlaneseq
    %v1900 = vshrl.u32 %v1899, 7
    %v1901 = vsub.s32 3, %v1900
    %v1902 = vrot.slane %v1729, %v1901
    %v1905 = vlaneseq
    %v1906 = vshrl.u32 %v1905, 7
    %v1907 = vsub.s32 1, %v1906
    %v1908 = vrot.slane %v1898, %v1907
    %v1909 = vlaneseq
    %v1910 = vshrl.u32 %v1909, 7
    %v1911 = vsub.s32 1, %v1910
    %v1912 = vrot.slane %v1902, %v1911
    %v1913 = vmul.f32 %v1511, %v1908
    %v1914 = vmul.f32 %v1518, %v1912
    %v1915 = vmul.f32 %v1525, %v1908
    %v1916 = vmul.f32 %v1532, %v1912
    %v1917 = vmul.f32 %v1539, %v1908
    %v1918 = vmul.f32 %v1546, %v1912
    %v1919 = vmul.f32 %v1553, %v1908
    %v1920 = vmul.f32 %v1560, %v1912
    %v1921 = vmul.f32 %v1567, %v1908
    %v1922 = vmul.f32 %v1574, %v1912
    %v1923 = vmul.f32 %v1581, %v1908
    %v1924 = vmul.f32 %v1588, %v1912
    %v1925 = vmul.f32 %v1595, %v1908
    %v1926 = vmul.f32 %v1602, %v1912
    %v1927 = vmul.f32 %v1609, %v1908
    %v1928 = vmul.f32 %v1616, %v1912
    %v1929 = vmul.f32 %v1623, %v1908
    %v1930 = vmul.f32 %v1630, %v1912
    %v1931 = vmul.f32 %v1637, %v1908
    %v1932 = vmul.f32 %v1644, %v1912
    %v1933 = vmul.f32 %v1651, %v1908
    %v1934 = vmul.f32 %v1658, %v1912
    %v1935 = vmul.f32 %v1665, %v1908
    %v1936 = vmul.f32 %v1672, %v1912
    %v1937 = vmul.f32 %v1679, %v1908
    %v1938 = vmul.f32 %v1686, %v1912
    %v1939 = vmul.f32 %v1693, %v1908
    %v1940 = vmul.f32 %v1700, %v1912
    %v1941 = vmul.f32 %v1707, %v1908
    %v1942 = vmul.f32 %v1714, %v1912
    %v1943 = vmul.f32 %v1721, %v1908
    %v1944 = vmul.f32 %v1728, %v1912
    %v1977 = vrot.slane %v1915, 7
    %v1978 = vsel %vm1815, %v1977, %v1913
    %v1979 = vrot.slane %v1917, 6
    %v1980 = vsel %vm1818, %v1979, %v1978
    %v1981 = vrot.slane %v1919, 5
    %v1982 = vsel %vm1821, %v1981, %v1980
    %v1983 = vrot.slane %v1921, 4
    %v1984 = vsel %vm1824, %v1983, %v1982
    %v1985 = vrot.slane %v1923, 3
    %v1986 = vsel %vm1827, %v1985, %v1984
    %v1987 = vrot.slane %v1925, 2
    %v1988 = vsel %vm1830, %v1987, %v1986
    %v1989 = vrot.slane %v1927, 1
    %v1990 = vsel %vm1833, %v1989, %v1988
    %v1991 = vrot.slane %v1916, 7
    %v1992 = vsel %vm1815, %v1991, %v1914
    %v1993 = vrot.slane %v1918, 6
    %v1994 = vsel %vm1818, %v1993, %v1992
    %v1995 = vrot.slane %v1920, 5
    %v1996 = vsel %vm1821, %v1995, %v1994
    %v1997 = vrot.slane %v1922, 4
    %v1998 = vsel %vm1824, %v1997, %v1996
    %v1999 = vrot.slane %v1924, 3
    %v2000 = vsel %vm1827, %v1999, %v1998
    %v2001 = vrot.slane %v1926, 2
    %v2002 = vsel %vm1830, %v2001, %v2000
    %v2003 = vrot.slane %v1928, 1
    %v2004 = vsel %vm1833, %v2003, %v2002
    %v2005 = vrot.slane %v1931, 7
    %v2006 = vsel %vm1815, %v2005, %v1929
    %v2007 = vrot.slane %v1933, 6
    %v2008 = vsel %vm1818, %v2007, %v2006
    %v2009 = vrot.slane %v1935, 5
    %v2010 = vsel %vm1821, %v2009, %v2008
    %v2011 = vrot.slane %v1937, 4
    %v2012 = vsel %vm1824, %v2011, %v2010
    %v2013 = vrot.slane %v1939, 3
    %v2014 = vsel %vm1827, %v2013, %v2012
    %v2015 = vrot.slane %v1941, 2
    %v2016 = vsel %vm1830, %v2015, %v2014
    %v2017 = vrot.slane %v1943, 1
    %v2018 = vsel %vm1833, %v2017, %v2016
    %v2019 = vrot.slane %v1932, 7
    %v2020 = vsel %vm1815, %v2019, %v1930
    %v2021 = vrot.slane %v1934, 6
    %v2022 = vsel %vm1818, %v2021, %v2020
    %v2023 = vrot.slane %v1936, 5
    %v2024 = vsel %vm1821, %v2023, %v2022
    %v2025 = vrot.slane %v1938, 4
    %v2026 = vsel %vm1824, %v2025, %v2024
    %v2027 = vrot.slane %v1940, 3
    %v2028 = vsel %vm1827, %v2027, %v2026
    %v2029 = vrot.slane %v1942, 2
    %v2030 = vsel %vm1830, %v2029, %v2028
    %v2031 = vrot.slane %v1944, 1
    %v2032 = vsel %vm1833, %v2031, %v2030
    %v2037 = vadd.f32 %v1990, %v2004
    %2038 = vadd.xlane.f32.xlu0 %v2037
    %v2039 = vpop.xlane.xlu0 %2038
    %v2040 = vadd.f32 %v2018, %v2032
    %2041 = vadd.xlane.f32.xlu0 %v2040
    %v2042 = vpop.xlane.xlu0 %2041
    %v2043 = vadd.f32 %v2039, %v1891
    %v2044 = vadd.f32 %v2042, %v1891
    %v2045 = vmax.f32 %v1893, -1.0
    %v2046 = vmax.f32 %v1894, -1.0
    %v2047 = vmin.f32 %v2045, 1.0
    %v2048 = vmin.f32 %v2046, 1.0
    %v2049 = vmax.f32 %v2043, -1.0
    %v2050 = vmax.f32 %v2044, -1.0
    %v2051 = vmin.f32 %v2049, 1.0
    %v2052 = vmin.f32 %v2050, 1.0
    %v2053 = vadd.f32 %v2047, 0.999999
    %v2054 = vadd.f32 %v2048, 0.999999
    %v2055 = vmul.f32 %v2053, 0.5
    %v2056 = vmul.f32 %v2054, 0.5
    %v2057 = vmul.f32 %v2055, 16.0
    %v2058 = vmul.f32 %v2056, 16.0
    %v2059 = vcvt.f32.s32.to.zero.pseudo %v2057
    %v2060 = vcvt.f32.s32.to.zero.pseudo %v2058
    %v2061 = vadd.f32 %v2051, 0.999999
    %v2062 = vadd.f32 %v2052, 0.999999
    %v2063 = vmul.f32 %v2061, 0.5
    %v2064 = vmul.f32 %v2062, 0.5
    %v2065 = vmul.f32 %v2063, 16.0
    %v2066 = vmul.f32 %v2064, 16.0
    %v2067 = vcvt.f32.s32.to.zero.pseudo %v2065
    %v2068 = vcvt.f32.s32.to.zero.pseudo %v2066
    %v2069 = vmul.u32 %v2067, 16
    %v2070 = vmul.u32 %v2068, 16
    %2071 = vrot.lane.b32.xlu0 %v2059, 1
    %v2072 = vpop.permute.xlu0 %2071
    %2073 = vrot.lane.b32.xlu0 %v2060, 1
    %v2074 = vpop.permute.xlu0 %2073
    %v2075 = vadd.s32 %v2069, %v2072
    %v2076 = vadd.s32 %v2070, %v2074
    %v2077 = vlaneseq
    %v2078 = vand.u32 %v2077, 127
    %v2079 = vadd.s32 %v2078, 128
    %2080 = vset.pattern.permute.xlu0 1
    %2081 = vperm.xlu0 %2080, %v2075
    %v2082 = vpop.permute.xlu0 %2081
    %2083 = vset.pattern.permute.xlu0 1
    %2084 = vperm.xlu0 %2083, %v2076
    %v2085 = vpop.permute.xlu0 %2084
    %vm2086 = vcmp.eq.s32.totalorder %v2078, %v2082
    %vm2087 = vcmp.eq.s32.totalorder %v2079, %v2082
    %vm2088 = vcmp.eq.s32.totalorder %v2078, %v2085
    %vm2089 = vcmp.eq.s32.totalorder %v2079, %v2085
    %v2090 = vsel %vm2086, 1, 0
    %v2091 = vsel %vm2087, 1, 0
    %v2092 = vsel %vm2088, 1, 0
    %v2093 = vsel %vm2089, 1, 0
    %v2094 = vcvt.s32.f32 %v2090
    %v2095 = vcvt.s32.f32 %v2091
    %v2096 = vcvt.s32.f32 %v2092
    %v2097 = vcvt.s32.f32 %v2093
    %v2100 = vcombine.low %v2094, %v2095
    %v2101 = vcombine.high %v2094, %v2095
    %v2103 = vunpack.c.l.s4 1966171168
    %v2104 = vunpack.c.0.s8 %v2103
    %v2105 = vlaneseq
    %v2106 = vshrl.u32 %v2105, 7
    %v2107 = vsub.s32 %v2104, %v2106
    %v2108 = vrot.slane %v2100, %v2107
    %v2110 = vunpack.c.l.s4 1966171168
    %v2111 = vunpack.c.0.s8 %v2110
    %v2112 = vlaneseq
    %v2113 = vshrl.u32 %v2112, 7
    %v2114 = vsub.s32 %v2111, %v2113
    %v2115 = vrot.slane %v2101, %v2114
    %v2116 = vcombine.high %v2108, %v2108
    %v2117 = vcombine.high %v2115, %v2115
    %v2119 = vunpack.c.l.s4 1966171168
    %v2120 = vunpack.c.0.s8 %v2119
    %v2121 = vlaneseq
    %v2122 = vshrl.u32 %v2121, 7
    %v2123 = vsub.s32 %v2120, %v2122
    %v2124 = vrot.slane %v2108, %v2123
    %v2126 = vunpack.c.l.s4 1966171168
    %v2127 = vunpack.c.0.s8 %v2126
    %v2128 = vlaneseq
    %v2129 = vshrl.u32 %v2128, 7
    %v2130 = vsub.s32 %v2127, %v2129
    %v2131 = vrot.slane %v2115, %v2130
    %v2133 = vunpack.c.l.s4 1966171168
    %v2134 = vunpack.c.0.s8 %v2133
    %v2135 = vlaneseq
    %v2136 = vshrl.u32 %v2135, 7
    %v2137 = vsub.s32 %v2134, %v2136
    %v2138 = vrot.slane %v2116, %v2137
    %v2140 = vunpack.c.l.s4 1966171168
    %v2141 = vunpack.c.0.s8 %v2140
    %v2142 = vlaneseq
    %v2143 = vshrl.u32 %v2142, 7
    %v2144 = vsub.s32 %v2141, %v2143
    %v2145 = vrot.slane %v2117, %v2144
    %v2146 = vcombine.high %v2124, %v2124
    %v2147 = vcombine.high %v2131, %v2131
    %v2148 = vcombine.high %v2138, %v2138
    %v2149 = vcombine.high %v2145, %v2145
    %v2150 = vlaneseq
    %v2151 = vshrl.u32 %v2150, 7
    %v2152 = vsub.s32 0, %v2151
    %v2153 = vrot.slane %v2124, %v2152
    %v2154 = vlaneseq
    %v2155 = vshrl.u32 %v2154, 7
    %v2156 = vsub.s32 1, %v2155
    %v2157 = vrot.slane %v2124, %v2156
    %v2158 = vlaneseq
    %v2159 = vshrl.u32 %v2158, 7
    %v2160 = vsub.s32 0, %v2159
    %v2161 = vrot.slane %v2138, %v2160
    %v2162 = vlaneseq
    %v2163 = vshrl.u32 %v2162, 7
    %v2164 = vsub.s32 1, %v2163
    %v2165 = vrot.slane %v2138, %v2164
    %v2166 = vlaneseq
    %v2167 = vshrl.u32 %v2166, 7
    %v2168 = vsub.s32 0, %v2167
    %v2169 = vrot.slane %v2146, %v2168
    %v2170 = vlaneseq
    %v2171 = vshrl.u32 %v2170, 7
    %v2172 = vsub.s32 1, %v2171
    %v2173 = vrot.slane %v2146, %v2172
    %v2174 = vlaneseq
    %v2175 = vshrl.u32 %v2174, 7
    %v2176 = vsub.s32 0, %v2175
    %v2177 = vrot.slane %v2148, %v2176
    %v2178 = vlaneseq
    %v2179 = vshrl.u32 %v2178, 7
    %v2180 = vsub.s32 1, %v2179
    %v2181 = vrot.slane %v2148, %v2180
    %v2182 = vlaneseq
    %v2183 = vshrl.u32 %v2182, 7
    %v2184 = vsub.s32 0, %v2183
    %v2185 = vrot.slane %v2131, %v2184
    %v2186 = vlaneseq
    %v2187 = vshrl.u32 %v2186, 7
    %v2188 = vsub.s32 1, %v2187
    %v2189 = vrot.slane %v2131, %v2188
    %v2190 = vlaneseq
    %v2191 = vshrl.u32 %v2190, 7
    %v2192 = vsub.s32 0, %v2191
    %v2193 = vrot.slane %v2145, %v2192
    %v2194 = vlaneseq
    %v2195 = vshrl.u32 %v2194, 7
    %v2196 = vsub.s32 1, %v2195
    %v2197 = vrot.slane %v2145, %v2196
    %v2198 = vlaneseq
    %v2199 = vshrl.u32 %v2198, 7
    %v2200 = vsub.s32 0, %v2199
    %v2201 = vrot.slane %v2147, %v2200
    %v2202 = vlaneseq
    %v2203 = vshrl.u32 %v2202, 7
    %v2204 = vsub.s32 1, %v2203
    %v2205 = vrot.slane %v2147, %v2204
    %v2206 = vlaneseq
    %v2207 = vshrl.u32 %v2206, 7
    %v2208 = vsub.s32 0, %v2207
    %v2209 = vrot.slane %v2149, %v2208
    %v2210 = vlaneseq
    %v2211 = vshrl.u32 %v2210, 7
    %v2212 = vsub.s32 1, %v2211
    %v2213 = vrot.slane %v2149, %v2212
    %v2230 = vmul.f32 %v1441, %v2153
    %v2231 = vmul.f32 %v1442, %v2157
    %v2232 = vmul.f32 %v1443, %v2153
    %v2233 = vmul.f32 %v1444, %v2157
    %v2234 = vmul.f32 %v1445, %v2161
    %v2235 = vmul.f32 %v1446, %v2165
    %v2236 = vmul.f32 %v1447, %v2161
    %v2237 = vmul.f32 %v1448, %v2165
    %v2238 = vmul.f32 %v1449, %v2169
    %v2239 = vmul.f32 %v1450, %v2173
    %v2240 = vmul.f32 %v1451, %v2169
    %v2241 = vmul.f32 %v1452, %v2173
    %v2242 = vmul.f32 %v1453, %v2177
    %v2243 = vmul.f32 %v1454, %v2181
    %v2244 = vmul.f32 %v1455, %v2177
    %v2245 = vmul.f32 %v1456, %v2181
    %v2246 = vmul.f32 %v1457, %v2185
    %v2247 = vmul.f32 %v1458, %v2189
    %v2248 = vmul.f32 %v1459, %v2185
    %v2249 = vmul.f32 %v1460, %v2189
    %v2250 = vmul.f32 %v1461, %v2193
    %v2251 = vmul.f32 %v1462, %v2197
    %v2252 = vmul.f32 %v1463, %v2193
    %v2253 = vmul.f32 %v1464, %v2197
    %v2254 = vmul.f32 %v1465, %v2201
    %v2255 = vmul.f32 %v1466, %v2205
    %v2256 = vmul.f32 %v1467, %v2201
    %v2257 = vmul.f32 %v1468, %v2205
    %v2258 = vmul.f32 %v1469, %v2209
    %v2259 = vmul.f32 %v1470, %v2213
    %v2260 = vmul.f32 %v1471, %v2209
    %v2261 = vmul.f32 %v1472, %v2213
    %v2262 = vadd.f32 %v2230, %v2231
    %2263 = vadd.xlane.f32.xlu0 %v2262
    %v2264 = vpop.xlane.xlu0 %2263
    %v2265 = vadd.f32 %v2232, %v2233
    %2266 = vadd.xlane.f32.xlu0 %v2265
    %v2267 = vpop.xlane.xlu0 %2266
    %v2268 = vadd.f32 %v2234, %v2235
    %2269 = vadd.xlane.f32.xlu0 %v2268
    %v2270 = vpop.xlane.xlu0 %2269
    %v2271 = vadd.f32 %v2236, %v2237
    %2272 = vadd.xlane.f32.xlu0 %v2271
    %v2273 = vpop.xlane.xlu0 %2272
    %v2274 = vadd.f32 %v2238, %v2239
    %2275 = vadd.xlane.f32.xlu0 %v2274
    %v2276 = vpop.xlane.xlu0 %2275
    %v2277 = vadd.f32 %v2240, %v2241
    %2278 = vadd.xlane.f32.xlu0 %v2277
    %v2279 = vpop.xlane.xlu0 %2278
    %v2280 = vadd.f32 %v2242, %v2243
    %2281 = vadd.xlane.f32.xlu0 %v2280
    %v2282 = vpop.xlane.xlu0 %2281
    %v2283 = vadd.f32 %v2244, %v2245
    %2284 = vadd.xlane.f32.xlu0 %v2283
    %v2285 = vpop.xlane.xlu0 %2284
    %v2286 = vadd.f32 %v2246, %v2247
    %2287 = vadd.xlane.f32.xlu0 %v2286
    %v2288 = vpop.xlane.xlu0 %2287
    %v2289 = vadd.f32 %v2248, %v2249
    %2290 = vadd.xlane.f32.xlu0 %v2289
    %v2291 = vpop.xlane.xlu0 %2290
    %v2292 = vadd.f32 %v2250, %v2251
    %2293 = vadd.xlane.f32.xlu0 %v2292
    %v2294 = vpop.xlane.xlu0 %2293
    %v2295 = vadd.f32 %v2252, %v2253
    %2296 = vadd.xlane.f32.xlu0 %v2295
    %v2297 = vpop.xlane.xlu0 %2296
    %v2298 = vadd.f32 %v2254, %v2255
    %2299 = vadd.xlane.f32.xlu0 %v2298
    %v2300 = vpop.xlane.xlu0 %2299
    %v2301 = vadd.f32 %v2256, %v2257
    %2302 = vadd.xlane.f32.xlu0 %v2301
    %v2303 = vpop.xlane.xlu0 %2302
    %v2304 = vadd.f32 %v2258, %v2259
    %2305 = vadd.xlane.f32.xlu0 %v2304
    %v2306 = vpop.xlane.xlu0 %2305
    %v2307 = vadd.f32 %v2260, %v2261
    %2308 = vadd.xlane.f32.xlu0 %v2307
    %v2309 = vpop.xlane.xlu0 %2308
    %v2312 = vcombine.low %v2096, %v2097
    %v2313 = vcombine.high %v2096, %v2097
    %v2315 = vunpack.c.l.s4 1966171168
    %v2316 = vunpack.c.0.s8 %v2315
    %v2317 = vlaneseq
    %v2318 = vshrl.u32 %v2317, 7
    %v2319 = vsub.s32 %v2316, %v2318
    %v2320 = vrot.slane %v2312, %v2319
    %v2322 = vunpack.c.l.s4 1966171168
    %v2323 = vunpack.c.0.s8 %v2322
    %v2324 = vlaneseq
    %v2325 = vshrl.u32 %v2324, 7
    %v2326 = vsub.s32 %v2323, %v2325
    %v2327 = vrot.slane %v2313, %v2326
    %v2328 = vcombine.high %v2320, %v2320
    %v2329 = vcombine.high %v2327, %v2327
    %v2331 = vunpack.c.l.s4 1966171168
    %v2332 = vunpack.c.0.s8 %v2331
    %v2333 = vlaneseq
    %v2334 = vshrl.u32 %v2333, 7
    %v2335 = vsub.s32 %v2332, %v2334
    %v2336 = vrot.slane %v2320, %v2335
    %v2338 = vunpack.c.l.s4 1966171168
    %v2339 = vunpack.c.0.s8 %v2338
    %v2340 = vlaneseq
    %v2341 = vshrl.u32 %v2340, 7
    %v2342 = vsub.s32 %v2339, %v2341
    %v2343 = vrot.slane %v2327, %v2342
    %v2345 = vunpack.c.l.s4 1966171168
    %v2346 = vunpack.c.0.s8 %v2345
    %v2347 = vlaneseq
    %v2348 = vshrl.u32 %v2347, 7
    %v2349 = vsub.s32 %v2346, %v2348
    %v2350 = vrot.slane %v2328, %v2349
    %v2352 = vunpack.c.l.s4 1966171168
    %v2353 = vunpack.c.0.s8 %v2352
    %v2354 = vlaneseq
    %v2355 = vshrl.u32 %v2354, 7
    %v2356 = vsub.s32 %v2353, %v2355
    %v2357 = vrot.slane %v2329, %v2356
    %v2358 = vcombine.high %v2336, %v2336
    %v2359 = vcombine.high %v2343, %v2343
    %v2360 = vcombine.high %v2350, %v2350
    %v2361 = vcombine.high %v2357, %v2357
    %v2362 = vlaneseq
    %v2363 = vshrl.u32 %v2362, 7
    %v2364 = vsub.s32 0, %v2363
    %v2365 = vrot.slane %v2336, %v2364
    %v2366 = vlaneseq
    %v2367 = vshrl.u32 %v2366, 7
    %v2368 = vsub.s32 1, %v2367
    %v2369 = vrot.slane %v2336, %v2368
    %v2370 = vlaneseq
    %v2371 = vshrl.u32 %v2370, 7
    %v2372 = vsub.s32 0, %v2371
    %v2373 = vrot.slane %v2350, %v2372
    %v2374 = vlaneseq
    %v2375 = vshrl.u32 %v2374, 7
    %v2376 = vsub.s32 1, %v2375
    %v2377 = vrot.slane %v2350, %v2376
    %v2378 = vlaneseq
    %v2379 = vshrl.u32 %v2378, 7
    %v2380 = vsub.s32 0, %v2379
    %v2381 = vrot.slane %v2358, %v2380
    %v2382 = vlaneseq
    %v2383 = vshrl.u32 %v2382, 7
    %v2384 = vsub.s32 1, %v2383
    %v2385 = vrot.slane %v2358, %v2384
    %v2386 = vlaneseq
    %v2387 = vshrl.u32 %v2386, 7
    %v2388 = vsub.s32 0, %v2387
    %v2389 = vrot.slane %v2360, %v2388
    %v2390 = vlaneseq
    %v2391 = vshrl.u32 %v2390, 7
    %v2392 = vsub.s32 1, %v2391
    %v2393 = vrot.slane %v2360, %v2392
    %v2394 = vlaneseq
    %v2395 = vshrl.u32 %v2394, 7
    %v2396 = vsub.s32 0, %v2395
    %v2397 = vrot.slane %v2343, %v2396
    %v2398 = vlaneseq
    %v2399 = vshrl.u32 %v2398, 7
    %v2400 = vsub.s32 1, %v2399
    %v2401 = vrot.slane %v2343, %v2400
    %v2402 = vlaneseq
    %v2403 = vshrl.u32 %v2402, 7
    %v2404 = vsub.s32 0, %v2403
    %v2405 = vrot.slane %v2357, %v2404
    %v2406 = vlaneseq
    %v2407 = vshrl.u32 %v2406, 7
    %v2408 = vsub.s32 1, %v2407
    %v2409 = vrot.slane %v2357, %v2408
    %v2410 = vlaneseq
    %v2411 = vshrl.u32 %v2410, 7
    %v2412 = vsub.s32 0, %v2411
    %v2413 = vrot.slane %v2359, %v2412
    %v2414 = vlaneseq
    %v2415 = vshrl.u32 %v2414, 7
    %v2416 = vsub.s32 1, %v2415
    %v2417 = vrot.slane %v2359, %v2416
    %v2418 = vlaneseq
    %v2419 = vshrl.u32 %v2418, 7
    %v2420 = vsub.s32 0, %v2419
    %v2421 = vrot.slane %v2361, %v2420
    %v2422 = vlaneseq
    %v2423 = vshrl.u32 %v2422, 7
    %v2424 = vsub.s32 1, %v2423
    %v2425 = vrot.slane %v2361, %v2424
    %v2442 = vmul.f32 %v1441, %v2365
    %v2443 = vmul.f32 %v1442, %v2369
    %v2444 = vmul.f32 %v1443, %v2365
    %v2445 = vmul.f32 %v1444, %v2369
    %v2446 = vmul.f32 %v1445, %v2373
    %v2447 = vmul.f32 %v1446, %v2377
    %v2448 = vmul.f32 %v1447, %v2373
    %v2449 = vmul.f32 %v1448, %v2377
    %v2450 = vmul.f32 %v1449, %v2381
    %v2451 = vmul.f32 %v1450, %v2385
    %v2452 = vmul.f32 %v1451, %v2381
    %v2453 = vmul.f32 %v1452, %v2385
    %v2454 = vmul.f32 %v1453, %v2389
    %v2455 = vmul.f32 %v1454, %v2393
    %v2456 = vmul.f32 %v1455, %v2389
    %v2457 = vmul.f32 %v1456, %v2393
    %v2458 = vmul.f32 %v1457, %v2397
    %v2459 = vmul.f32 %v1458, %v2401
    %v2460 = vmul.f32 %v1459, %v2397
    %v2461 = vmul.f32 %v1460, %v2401
    %v2462 = vmul.f32 %v1461, %v2405
    %v2463 = vmul.f32 %v1462, %v2409
    %v2464 = vmul.f32 %v1463, %v2405
    %v2465 = vmul.f32 %v1464, %v2409
    %v2466 = vmul.f32 %v1465, %v2413
    %v2467 = vmul.f32 %v1466, %v2417
    %v2468 = vmul.f32 %v1467, %v2413
    %v2469 = vmul.f32 %v1468, %v2417
    %v2470 = vmul.f32 %v1469, %v2421
    %v2471 = vmul.f32 %v1470, %v2425
    %v2472 = vmul.f32 %v1471, %v2421
    %v2473 = vmul.f32 %v1472, %v2425
    %v2474 = vadd.f32 %v2442, %v2443
    %2475 = vadd.xlane.f32.xlu0 %v2474
    %v2476 = vpop.xlane.xlu0 %2475
    %v2477 = vadd.f32 %v2444, %v2445
    %2478 = vadd.xlane.f32.xlu0 %v2477
    %v2479 = vpop.xlane.xlu0 %2478
    %v2480 = vadd.f32 %v2446, %v2447
    %2481 = vadd.xlane.f32.xlu0 %v2480
    %v2482 = vpop.xlane.xlu0 %2481
    %v2483 = vadd.f32 %v2448, %v2449
    %2484 = vadd.xlane.f32.xlu0 %v2483
    %v2485 = vpop.xlane.xlu0 %2484
    %v2486 = vadd.f32 %v2450, %v2451
    %2487 = vadd.xlane.f32.xlu0 %v2486
    %v2488 = vpop.xlane.xlu0 %2487
    %v2489 = vadd.f32 %v2452, %v2453
    %2490 = vadd.xlane.f32.xlu0 %v2489
    %v2491 = vpop.xlane.xlu0 %2490
    %v2492 = vadd.f32 %v2454, %v2455
    %2493 = vadd.xlane.f32.xlu0 %v2492
    %v2494 = vpop.xlane.xlu0 %2493
    %v2495 = vadd.f32 %v2456, %v2457
    %2496 = vadd.xlane.f32.xlu0 %v2495
    %v2497 = vpop.xlane.xlu0 %2496
    %v2498 = vadd.f32 %v2458, %v2459
    %2499 = vadd.xlane.f32.xlu0 %v2498
    %v2500 = vpop.xlane.xlu0 %2499
    %v2501 = vadd.f32 %v2460, %v2461
    %2502 = vadd.xlane.f32.xlu0 %v2501
    %v2503 = vpop.xlane.xlu0 %2502
    %v2504 = vadd.f32 %v2462, %v2463
    %2505 = vadd.xlane.f32.xlu0 %v2504
    %v2506 = vpop.xlane.xlu0 %2505
    %v2507 = vadd.f32 %v2464, %v2465
    %2508 = vadd.xlane.f32.xlu0 %v2507
    %v2509 = vpop.xlane.xlu0 %2508
    %v2510 = vadd.f32 %v2466, %v2467
    %2511 = vadd.xlane.f32.xlu0 %v2510
    %v2512 = vpop.xlane.xlu0 %2511
    %v2513 = vadd.f32 %v2468, %v2469
    %2514 = vadd.xlane.f32.xlu0 %v2513
    %v2515 = vpop.xlane.xlu0 %2514
    %v2516 = vadd.f32 %v2470, %v2471
    %2517 = vadd.xlane.f32.xlu0 %v2516
    %v2518 = vpop.xlane.xlu0 %2517
    %v2519 = vadd.f32 %v2472, %v2473
    %2520 = vadd.xlane.f32.xlu0 %v2519
    %v2521 = vpop.xlane.xlu0 %2520
    %v2538 = vlaneseq
    %v2539 = vshrl.u32 %v2538, 7
    %v2540 = vsub.s32 %v2078, %v2539
    %v2541 = vrot.slane %v2264, %v2540
    %v2542 = vadd.s32 %v2078, 4294967288
    %v2543 = vlaneseq
    %v2544 = vshrl.u32 %v2543, 7
    %v2545 = vsub.s32 %v2542, %v2544
    %v2546 = vrot.slane %v2267, %v2545
    %vm2547 = vcmask 130112
    %v2548 = vsel %vm2547, %v2546, %v2541
    %v2549 = vlaneseq
    %v2550 = vshrl.u32 %v2549, 7
    %v2551 = vsub.s32 %v2078, %v2550
    %v2552 = vrot.slane %v2270, %v2551
    %v2553 = vlaneseq
    %v2554 = vshrl.u32 %v2553, 7
    %v2555 = vsub.s32 %v2542, %v2554
    %v2556 = vrot.slane %v2273, %v2555
    %v2557 = vsel %vm2547, %v2556, %v2552
    %v2558 = vlaneseq
    %v2559 = vshrl.u32 %v2558, 7
    %v2560 = vsub.s32 %v2078, %v2559
    %v2561 = vrot.slane %v2276, %v2560
    %v2562 = vlaneseq
    %v2563 = vshrl.u32 %v2562, 7
    %v2564 = vsub.s32 %v2542, %v2563
    %v2565 = vrot.slane %v2279, %v2564
    %v2566 = vsel %vm2547, %v2565, %v2561
    %v2567 = vlaneseq
    %v2568 = vshrl.u32 %v2567, 7
    %v2569 = vsub.s32 %v2078, %v2568
    %v2570 = vrot.slane %v2282, %v2569
    %v2571 = vlaneseq
    %v2572 = vshrl.u32 %v2571, 7
    %v2573 = vsub.s32 %v2542, %v2572
    %v2574 = vrot.slane %v2285, %v2573
    %v2575 = vsel %vm2547, %v2574, %v2570
    %v2576 = vlaneseq
    %v2577 = vshrl.u32 %v2576, 7
    %v2578 = vsub.s32 %v2078, %v2577
    %v2579 = vrot.slane %v2288, %v2578
    %v2580 = vlaneseq
    %v2581 = vshrl.u32 %v2580, 7
    %v2582 = vsub.s32 %v2542, %v2581
    %v2583 = vrot.slane %v2291, %v2582
    %v2584 = vsel %vm2547, %v2583, %v2579
    %v2585 = vlaneseq
    %v2586 = vshrl.u32 %v2585, 7
    %v2587 = vsub.s32 %v2078, %v2586
    %v2588 = vrot.slane %v2294, %v2587
    %v2589 = vlaneseq
    %v2590 = vshrl.u32 %v2589, 7
    %v2591 = vsub.s32 %v2542, %v2590
    %v2592 = vrot.slane %v2297, %v2591
    %v2593 = vsel %vm2547, %v2592, %v2588
    %v2594 = vlaneseq
    %v2595 = vshrl.u32 %v2594, 7
    %v2596 = vsub.s32 %v2078, %v2595
    %v2597 = vrot.slane %v2300, %v2596
    %v2598 = vlaneseq
    %v2599 = vshrl.u32 %v2598, 7
    %v2600 = vsub.s32 %v2542, %v2599
    %v2601 = vrot.slane %v2303, %v2600
    %v2602 = vsel %vm2547, %v2601, %v2597
    %v2603 = vlaneseq
    %v2604 = vshrl.u32 %v2603, 7
    %v2605 = vsub.s32 %v2078, %v2604
    %v2606 = vrot.slane %v2306, %v2605
    %v2607 = vlaneseq
    %v2608 = vshrl.u32 %v2607, 7
    %v2609 = vsub.s32 %v2542, %v2608
    %v2610 = vrot.slane %v2309, %v2609
    %v2611 = vsel %vm2547, %v2610, %v2606
    %v2612 = vsel %vm1815, %v2557, %v2548
    %v2613 = vsel %vm1818, %v2566, %v2612
    %v2614 = vsel %vm1821, %v2575, %v2613
    %v2615 = vsel %vm1824, %v2584, %v2614
    %v2616 = vsel %vm1827, %v2593, %v2615
    %v2617 = vsel %vm1830, %v2602, %v2616
    %v2618 = vsel %vm1833, %v2611, %v2617
    %v2635 = vlaneseq
    %v2636 = vshrl.u32 %v2635, 7
    %v2637 = vsub.s32 %v2078, %v2636
    %v2638 = vrot.slane %v2476, %v2637
    %v2639 = vlaneseq
    %v2640 = vshrl.u32 %v2639, 7
    %v2641 = vsub.s32 %v2542, %v2640
    %v2642 = vrot.slane %v2479, %v2641
    %v2643 = vsel %vm2547, %v2642, %v2638
    %v2644 = vlaneseq
    %v2645 = vshrl.u32 %v2644, 7
    %v2646 = vsub.s32 %v2078, %v2645
    %v2647 = vrot.slane %v2482, %v2646
    %v2648 = vlaneseq
    %v2649 = vshrl.u32 %v2648, 7
    %v2650 = vsub.s32 %v2542, %v2649
    %v2651 = vrot.slane %v2485, %v2650
    %v2652 = vsel %vm2547, %v2651, %v2647
    %v2653 = vlaneseq
    %v2654 = vshrl.u32 %v2653, 7
    %v2655 = vsub.s32 %v2078, %v2654
    %v2656 = vrot.slane %v2488, %v2655
    %v2657 = vlaneseq
    %v2658 = vshrl.u32 %v2657, 7
    %v2659 = vsub.s32 %v2542, %v2658
    %v2660 = vrot.slane %v2491, %v2659
    %v2661 = vsel %vm2547, %v2660, %v2656
    %v2662 = vlaneseq
    %v2663 = vshrl.u32 %v2662, 7
    %v2664 = vsub.s32 %v2078, %v2663
    %v2665 = vrot.slane %v2494, %v2664
    %v2666 = vlaneseq
    %v2667 = vshrl.u32 %v2666, 7
    %v2668 = vsub.s32 %v2542, %v2667
    %v2669 = vrot.slane %v2497, %v2668
    %v2670 = vsel %vm2547, %v2669, %v2665
    %v2671 = vlaneseq
    %v2672 = vshrl.u32 %v2671, 7
    %v2673 = vsub.s32 %v2078, %v2672
    %v2674 = vrot.slane %v2500, %v2673
    %v2675 = vlaneseq
    %v2676 = vshrl.u32 %v2675, 7
    %v2677 = vsub.s32 %v2542, %v2676
    %v2678 = vrot.slane %v2503, %v2677
    %v2679 = vsel %vm2547, %v2678, %v2674
    %v2680 = vlaneseq
    %v2681 = vshrl.u32 %v2680, 7
    %v2682 = vsub.s32 %v2078, %v2681
    %v2683 = vrot.slane %v2506, %v2682
    %v2684 = vlaneseq
    %v2685 = vshrl.u32 %v2684, 7
    %v2686 = vsub.s32 %v2542, %v2685
    %v2687 = vrot.slane %v2509, %v2686
    %v2688 = vsel %vm2547, %v2687, %v2683
    %v2689 = vlaneseq
    %v2690 = vshrl.u32 %v2689, 7
    %v2691 = vsub.s32 %v2078, %v2690
    %v2692 = vrot.slane %v2512, %v2691
    %v2693 = vlaneseq
    %v2694 = vshrl.u32 %v2693, 7
    %v2695 = vsub.s32 %v2542, %v2694
    %v2696 = vrot.slane %v2515, %v2695
    %v2697 = vsel %vm2547, %v2696, %v2692
    %v2698 = vlaneseq
    %v2699 = vshrl.u32 %v2698, 7
    %v2700 = vsub.s32 %v2078, %v2699
    %v2701 = vrot.slane %v2518, %v2700
    %v2702 = vlaneseq
    %v2703 = vshrl.u32 %v2702, 7
    %v2704 = vsub.s32 %v2542, %v2703
    %v2705 = vrot.slane %v2521, %v2704
    %v2706 = vsel %vm2547, %v2705, %v2701
    %v2707 = vsel %vm1815, %v2652, %v2643
    %v2708 = vsel %vm1818, %v2661, %v2707
    %v2709 = vsel %vm1821, %v2670, %v2708
    %v2710 = vsel %vm1824, %v2679, %v2709
    %v2711 = vsel %vm1827, %v2688, %v2710
    %v2712 = vsel %vm1830, %v2697, %v2711
    %v2713 = vsel %vm1833, %v2706, %v2712
    %2716 = vrot.lane.b32.xlu0 %v232, 112
    %v2717 = vpop.permute.xlu0 %2716
    %2718 = vrot.lane.b32.xlu0 %v237, 112
    %v2719 = vpop.permute.xlu0 %2718
    %2724 = vrot.lane.b32.xlu0 %v2047, 4
    %v2725 = vpop.permute.xlu0 %2724
    %2726 = vrot.lane.b32.xlu0 %v2048, 4
    %v2727 = vpop.permute.xlu0 %2726
    %2732 = vrot.lane.b32.xlu0 %v2051, 4
    %v2733 = vpop.permute.xlu0 %2732
    %2734 = vrot.lane.b32.xlu0 %v2052, 4
    %v2735 = vpop.permute.xlu0 %2734
    %2738 = vrot.lane.b32.xlu0 %v2618, 6
    %v2739 = vpop.permute.xlu0 %2738
    %2740 = vrot.lane.b32.xlu0 %v2713, 6
    %v2741 = vpop.permute.xlu0 %2740
    %vm2744 = vcmask 31744
    %v2745 = vsel %vm2744, %v2717, %v2725
    %v2746 = vsel %vm2744, %v2719, %v2727
    %vm2747 = vcmask 39936
    %v2748 = vsel %vm2747, %v2745, %v2733
    %v2749 = vsel %vm2747, %v2746, %v2735
    %vm2750 = vcmask 48128
    %v2751 = vsel %vm2750, %v2748, %v2739
    %v2752 = vsel %vm2750, %v2749, %v2741
    %vm2753 = vcmask 179200
    %v2754 = vsel %vm2753, %v2751, 0.0
    %v2755 = vsel %vm2753, %v2752, 0.0
    %2756 = vst [vmem:[#allocation7] sm:$0xff] %v2754
    %2757 = vst [vmem:[#allocation7 + $0x8] sm:$0xff] %v2755
    // Predicated region
    $region46: #{tpu_custom_call.1} parent=1 // pred_check
      _
    $region47: #{tpu_custom_call.1} parent=1 // pred_check_branch
      %2759 = sbr.rel (0) target = $region49
    $region48: #{tpu_custom_call.1} parent=1 // pred_region
      %s2761 = ssub.s32 256, 256
      %2762 = vsyncadd [#allocation6], %s2761
      %s2763 = sshll.u32 [#allocation7], 4
      %s2764 = int_to_ptr.vmem [resolvable:$true] %s2763
      %2769 = dma.vmem_to_hbm [thread:$0]  %s2764, 256, %s10, [#allocation6], 128, 128, 8
    $region49: #{tpu_custom_call.1} parent=1 // pred_fallthru
      _
    // Predicated region
    $region50: #{tpu_custom_call.1} parent=1 // pred_check
      _
    $region51: #{tpu_custom_call.1} parent=1 // pred_check_branch
      %2771 = sbr.rel (0) target = $region53
    $region52: #{tpu_custom_call.1} parent=1 // pred_region
      %2772 = dma.done [#allocation6], 256
    $region53: #{tpu_custom_call.1} parent=1 // pred_fallthru
      _
    %2773 = vsyncpa [#allocation5], 1
    %2774 = vsyncpa [#allocation6], 1

</llo_original>
